<compile_context>
chip_gen: v6e
topology: v6e:2x2x1
jax: 0.10.0
libtpu: 0.0.40
codegen_flags: <defaults>
</compile_context>

<pallas_src>
import functools
import math

import jax
import jax.numpy as jnp
from jax.experimental import pallas as pl
from jax.experimental.pallas import tpu as pltpu

_VMEM_LIMIT_BYTES = 48 * 1024 * 1024  # fits v7x (64 MiB physical) with headroom


# --------------------------------------------------------------------------------------
# helpers
# --------------------------------------------------------------------------------------
def _layer_norm_f32(z, w, b, eps=1e-5):
    # z: (rows, D) f32, w/b: (1, D) f32
    mu = jnp.mean(z, axis=-1, keepdims=True)
    var = jnp.mean(jnp.square(z - mu), axis=-1, keepdims=True)
    return (z - mu) * jax.lax.rsqrt(var + eps) * w + b


def _row_tile(n, target=256):
    """Largest tile <= target that divides n and is a multiple of 8 (or n itself)."""
    if n <= target:
        return n
    for t in range(min(target, n), 7, -1):
        if n % t == 0 and t % 8 == 0:
            return t
    return n


def _lane_tile(n, target=512):
    """Largest tile <= target that divides n and is a multiple of 128 (or n itself)."""
    if n <= target:
        return n
    for t in range(min(target, n), 127, -1):
        if n % t == 0 and t % 128 == 0:
            return t
    return n


# --------------------------------------------------------------------------------------
# kernel 1: LN1 + fused QKV projection (scale folded into Q)
# --------------------------------------------------------------------------------------
def _ln_qkv_kernel(x_ref, ln_w_ref, ln_b_ref, wqkv_ref, bqkv_ref,
                   q_ref, k_ref, v_ref, *, n_head):
    D = x_ref.shape[-1]
    scale = 1.0 / math.sqrt(D // n_head)

    x = x_ref[...].astype(jnp.float32)
    xn = _layer_norm_f32(x, ln_w_ref[...], ln_b_ref[...]).astype(jnp.bfloat16)
    qkv = jnp.dot(xn, wqkv_ref[...], preferred_element_type=jnp.float32) + bqkv_ref[...]
    q_ref[...] = (qkv[:, 0 * D:1 * D] * scale).astype(q_ref.dtype)
    k_ref[...] = qkv[:, 1 * D:2 * D].astype(k_ref.dtype)
    v_ref[...] = qkv[:, 2 * D:3 * D].astype(v_ref.dtype)


# --------------------------------------------------------------------------------------
# kernel 2: flash attention (online softmax over kv tiles; all heads in one grid step)
# --------------------------------------------------------------------------------------
def _flash_attn_kernel(q_ref, k_ref, v_ref, o_ref, m_sc, l_sc, acc_sc, *, n_head):
    ki = pl.program_id(2)
    _, TQ, D = q_ref.shape
    TK = k_ref.shape[1]
    H = n_head
    Dh = D // H

    @pl.when(ki == 0)
    def _():
        m_sc[...] = jnp.full(m_sc.shape, -jnp.inf, m_sc.dtype)
        l_sc[...] = jnp.zeros(l_sc.shape, l_sc.dtype)
        acc_sc[...] = jnp.zeros(acc_sc.shape, acc_sc.dtype)

    # tile-local head split: (TQ, D) -> (H, TQ, Dh) (transpose done in f32 for safe lowering)
    q = jnp.transpose(q_ref[...].astype(jnp.float32).reshape(TQ, H, Dh), (1, 0, 2))
    k = jnp.transpose(k_ref[...].astype(jnp.float32).reshape(TK, H, Dh), (1, 0, 2))
    v = jnp.transpose(v_ref[...].astype(jnp.float32).reshape(TK, H, Dh), (1, 0, 2))
    q = q.astype(jnp.bfloat16)
    k = k.astype(jnp.bfloat16)
    v = v.astype(jnp.bfloat16)

    # q was pre-scaled by 1/sqrt(Dh) at projection time
    s = jnp.einsum('hqd,hkd->hqk', q, k, preferred_element_type=jnp.float32)  # (H,TQ,TK)

    m_prev = m_sc[...]
    m_new = jnp.maximum(m_prev, jnp.max(s, axis=-1, keepdims=True))
    alpha = jnp.exp(m_prev - m_new)
    p = jnp.exp(s - m_new)
    l_sc[...] = alpha * l_sc[...] + jnp.sum(p, axis=-1, keepdims=True)
    acc_sc[...] = alpha * acc_sc[...] + jnp.einsum(
        'hqk,hkd->hqd', p.astype(jnp.bfloat16), v, preferred_element_type=jnp.float32)
    m_sc[...] = m_new

    @pl.when(ki == pl.num_programs(2) - 1)
    def _():
        ctx = acc_sc[...] * pl.reciprocal(l_sc[...], approx=True)          # (H, TQ, Dh)
        ctx = jnp.transpose(ctx, (1, 0, 2)).reshape(1, TQ, D)               # head concat
        o_ref[...] = ctx.astype(o_ref.dtype)


# --------------------------------------------------------------------------------------
# kernel 3: attention out-proj + residual + LN2 + c_fc + QuickGELU
# --------------------------------------------------------------------------------------
def _proj_ln2_fc_kernel(x_ref, ctx_ref, wo_ref, bo_ref, ln_w_ref, ln_b_ref,
                        wfc_ref, bfc_ref, x1_ref, h_ref):
    x = x_ref[...].astype(jnp.float32)
    attn = jnp.dot(ctx_ref[...], wo_ref[...], preferred_element_type=jnp.float32) + bo_ref[...]
    x1 = x + attn
    x1_ref[...] = x1.astype(x1_ref.dtype)

    xn2 = _layer_norm_f32(x1, ln_w_ref[...], ln_b_ref[...]).astype(jnp.bfloat16)
    h = jnp.dot(xn2, wfc_ref[...], preferred_element_type=jnp.float32) + bfc_ref[...]
    h = h * (1.0 / (1.0 + jnp.exp(-1.702 * h)))   # QuickGELU in f32
    h_ref[...] = h.astype(h_ref.dtype)


# --------------------------------------------------------------------------------------
# kernel 4: c_proj (K-reduction grid axis, f32 VMEM accumulator) + bias + residual
# --------------------------------------------------------------------------------------
def _cproj_residual_kernel(h_ref, wpr_ref, bpr_ref, x1_ref, o_ref, acc_ref):
    kk = pl.program_id(1)

    @pl.when(kk == 0)
    def _():
        acc_ref[...] = jnp.zeros(acc_ref.shape, acc_ref.dtype)

    acc_ref[...] += jnp.dot(h_ref[...], wpr_ref[...], preferred_element_type=jnp.float32)

    @pl.when(kk == pl.num_programs(1) - 1)
    def _():
        o_ref[...] = (acc_ref[...] + bpr_ref[...] + x1_ref[...]).astype(o_ref.dtype)


# --------------------------------------------------------------------------------------
# block forward
# --------------------------------------------------------------------------------------
def residual_attention_block_bsd(x_bsd, p, *, n_head):
    """One ResidualAttentionBlock; x_bsd: (B, S, D) in the caller's dtype."""
    B, S, D = x_bsd.shape
    assert D % n_head == 0
    H = n_head
    Dh = D // H
    N = B * S
    out_dtype = x_bsd.dtype
    x2d = x_bsd.reshape(N, D)

    TM = _row_tile(N, 256)
    n_rows = N // TM

    row_cparams = pltpu.CompilerParams(
        dimension_semantics=("parallel",), vmem_limit_bytes=_VMEM_LIMIT_BYTES)

    def _const2d(shape):
        return pl.BlockSpec(shape, lambda i: (0, 0))

    # ---- stage 1: LN1 + QKV projection ----
    q2d, k2d, v2d = pl.pallas_call(
        functools.partial(_ln_qkv_kernel, n_head=n_head),
        out_shape=tuple(jax.ShapeDtypeStruct((N, D), jnp.bfloat16) for _ in range(3)),
        grid_spec=pltpu.PrefetchScalarGridSpec(
            num_scalar_prefetch=0,
            grid=(n_rows,),
            in_specs=[
                pl.BlockSpec((TM, D), lambda i: (i, 0)),
                _const2d((1, D)), _const2d((1, D)),
                _const2d((D, 3 * D)), _const2d((1, 3 * D)),
            ],
            out_specs=[pl.BlockSpec((TM, D), lambda i: (i, 0))] * 3,
        ),
        compiler_params=row_cparams,
    )(x2d, p['ln1w'], p['ln1b'], p['wqkv'], p['bqkv'])

    # ---- stage 2: flash attention ----
    q3 = q2d.reshape(B, S, D)
    k3 = k2d.reshape(B, S, D)
    v3 = v2d.reshape(B, S, D)
    TQ = _row_tile(S, 128)
    TK = _row_tile(S, 128)
    ctx = pl.pallas_call(
        functools.partial(_flash_attn_kernel, n_head=n_head),
        out_shape=jax.ShapeDtypeStruct((B, S, D), jnp.bfloat16),
        grid_spec=pltpu.PrefetchScalarGridSpec(
            num_scalar_prefetch=0,
            grid=(B, S // TQ, S // TK),
            in_specs=[
                pl.BlockSpec((1, TQ, D), lambda b, qi, ki: (b, qi, 0)),
                pl.BlockSpec((1, TK, D), lambda b, qi, ki: (b, ki, 0)),
                pl.BlockSpec((1, TK, D), lambda b, qi, ki: (b, ki, 0)),
            ],
            out_specs=pl.BlockSpec((1, TQ, D), lambda b, qi, ki: (b, qi, 0)),
            scratch_shapes=[
                pltpu.VMEM((H, TQ, 1), jnp.float32),    # running max
                pltpu.VMEM((H, TQ, 1), jnp.float32),    # running denom
                pltpu.VMEM((H, TQ, Dh), jnp.float32),   # output accumulator
            ],
        ),
        compiler_params=pltpu.CompilerParams(
            dimension_semantics=("parallel", "parallel", "arbitrary"),
            vmem_limit_bytes=_VMEM_LIMIT_BYTES),
    )(q3, k3, v3)
    ctx2d = ctx.reshape(N, D)

    # ---- stage 3: out-proj + residual + LN2 + c_fc + QuickGELU ----
    x1, h = pl.pallas_call(
        _proj_ln2_fc_kernel,
        out_shape=(jax.ShapeDtypeStruct((N, D), jnp.float32),
                   jax.ShapeDtypeStruct((N, 4 * D), jnp.bfloat16)),
        grid_spec=pltpu.PrefetchScalarGridSpec(
            num_scalar_prefetch=0,
            grid=(n_rows,),
            in_specs=[
                pl.BlockSpec((TM, D), lambda i: (i, 0)),      # residual x
                pl.BlockSpec((TM, D), lambda i: (i, 0)),      # attention context
                _const2d((D, D)), _const2d((1, D)),
                _const2d((1, D)), _const2d((1, D)),
                _const2d((D, 4 * D)), _const2d((1, 4 * D)),
            ],
            out_specs=[pl.BlockSpec((TM, D), lambda i: (i, 0)),
                       pl.BlockSpec((TM, 4 * D), lambda i: (i, 0))],
        ),
        compiler_params=row_cparams,
    )(x2d, ctx2d, p['wo'], p['bo'], p['ln2w'], p['ln2b'], p['wfc'], p['bfc'])

    # ---- stage 4: c_proj (K-tiled reduction) + residual ----
    K = 4 * D
    TKm = _lane_tile(K, 512)
    nk = K // TKm
    out2d = pl.pallas_call(
        _cproj_residual_kernel,
        out_shape=jax.ShapeDtypeStruct((N, D), out_dtype),
        grid_spec=pltpu.PrefetchScalarGridSpec(
            num_scalar_prefetch=0,
            grid=(n_rows, nk),
            in_specs=[
                pl.BlockSpec((TM, TKm), lambda i, kk: (i, kk)),
                pl.BlockSpec((TKm, D), lambda i, kk: (kk, 0)),
                pl.BlockSpec((1, D), lambda i, kk: (0, 0)),
                pl.BlockSpec((TM, D), lambda i, kk: (i, 0)),
            ],
            out_specs=pl.BlockSpec((TM, D), lambda i, kk: (i, 0)),
            scratch_shapes=[pltpu.VMEM((TM, D), jnp.float32)],
        ),
        compiler_params=pltpu.CompilerParams(
            dimension_semantics=("parallel", "arbitrary"),
            vmem_limit_bytes=_VMEM_LIMIT_BYTES),
    )(h, p['wpr'], p['bpr'], x1)

    return out2d.reshape(B, S, D)


def residual_attention_block(x, params, *, n_head):
    """ResidualAttentionBlock.forward; x: (S, B, D) like the PyTorch module."""
    x_bsd = jnp.transpose(x, (1, 0, 2))                       # layout plumbing (XLA)
    y_bsd = residual_attention_block_bsd(x_bsd, params, n_head=n_head)
    return jnp.transpose(y_bsd, (1, 0, 2)).astype(x.dtype)


def transformer_forward(x, params_list, *, n_head):
    """Stack of blocks; layout transpose hoisted across layers."""
    x_bsd = jnp.transpose(x, (1, 0, 2))
    for p in params_list:
        x_bsd = residual_attention_block_bsd(x_bsd, p, n_head=n_head)
    return jnp.transpose(x_bsd, (1, 0, 2)).astype(x.dtype)


# --------------------------------------------------------------------------------------
# parameters + pure-JAX reference
# --------------------------------------------------------------------------------------
def init_block_params(key, width):
    """Weights pre-transposed (x @ W) and stored bf16 in HBM; LN/bias params f32."""
    D = width
    ks = jax.random.split(key, 8)
    sc = 0.02
    return dict(
        ln1w=jnp.ones((1, D), jnp.float32),
        ln1b=jnp.zeros((1, D), jnp.float32),
        wqkv=(sc * jax.random.normal(ks[0], (D, 3 * D), jnp.float32)).astype(jnp.bfloat16),
        bqkv=sc * jax.random.normal(ks[1], (1, 3 * D), jnp.float32),
        wo=(sc * jax.random.normal(ks[2], (D, D), jnp.float32)).astype(jnp.bfloat16),
        bo=sc * jax.random.normal(ks[3], (1, D), jnp.float32),
        ln2w=jnp.ones((1, D), jnp.float32),
        ln2b=jnp.zeros((1, D), jnp.float32),
        wfc=(sc * jax.random.normal(ks[4], (D, 4 * D), jnp.float32)).astype(jnp.bfloat16),
        bfc=sc * jax.random.normal(ks[5], (1, 4 * D), jnp.float32),
        wpr=(sc * jax.random.normal(ks[6], (4 * D, D), jnp.float32)).astype(jnp.bfloat16),
        bpr=sc * jax.random.normal(ks[7], (1, D), jnp.float32),
    )


def reference_block(x, p, n_head):
    """Pure-JAX f32 reference (same bf16-stored weights upcast to f32)."""
    S, B, D = x.shape
    H, Dh = n_head, D // n_head
    xf = x.astype(jnp.float32)

    def ln(z, w, b):
        mu = z.mean(-1, keepdims=True)
        var = jnp.square(z - mu).mean(-1, keepdims=True)
        return (z - mu) * jax.lax.rsqrt(var + 1e-5) * w[0] + b[0]

    xn = ln(xf, p['ln1w'], p['ln1b'])
    qkv = xn @ p['wqkv'].astype(jnp.float32) + p['bqkv'][0]
    q, k, v = qkv[..., :D], qkv[..., D:2 * D], qkv[..., 2 * D:]

    def split(t):  # (S,B,D) -> (B,H,S,Dh)
        return jnp.transpose(t.reshape(S, B, H, Dh), (1, 2, 0, 3))

    qh, kh, vh = split(q), split(k), split(v)
    s = jnp.einsum('bhqd,bhkd->bhqk', qh, kh) / math.sqrt(Dh)
    pa = jax.nn.softmax(s, axis=-1)
    ctx = jnp.einsum('bhqk,bhkd->bhqd', pa, vh)
    ctx = jnp.transpose(ctx, (2, 0, 1, 3)).reshape(S, B, D)
    x1 = xf + ctx @ p['wo'].astype(jnp.float32) + p['bo'][0]

    xn2 = ln(x1, p['ln2w'], p['ln2b'])
    h = xn2 @ p['wfc'].astype(jnp.float32) + p['bfc'][0]
    h = h * (1.0 / (1.0 + jnp.exp(-1.702 * h)))
    out = x1 + h @ p['wpr'].astype(jnp.float32) + p['bpr'][0]
    return out.astype(x.dtype)


# --------------------------------------------------------------------------------------
if __name__ == "__main__":
    SEQ, BATCH, WIDTH, HEADS = 8, 2, 64, 4

    key = jax.random.PRNGKey(0)
    xk, pk = jax.random.split(key)
    x = jax.random.normal(xk, (SEQ, BATCH, WIDTH), dtype=jnp.float32)   # (seq, batch, width)
    params = init_block_params(pk, WIDTH)

    fwd = jax.jit(functools.partial(residual_attention_block, n_head=HEADS))
    out = fwd(x, params)
    jax.block_until_ready(out)

    assert out.shape == (SEQ, BATCH, WIDTH) and out.dtype == x.dtype
    ref = reference_block(x, params, HEADS)
    max_err = float(jnp.max(jnp.abs(out - ref)))
    assert jnp.all(jnp.isfinite(out)) and max_err < 5e-2, f"max abs err {max_err}"
    print("KERNEL_OK")
</pallas_src>

<mosaic_0001>
module attributes {stable_mosaic.version = 11 : i64} {
  func.func @_ln_qkv_kernel(%arg0: i32, %arg1: memref<16x64xf32, #tpu.memory_space<vmem>>, %arg2: memref<1x64xf32, #tpu.memory_space<vmem>>, %arg3: memref<1x64xf32, #tpu.memory_space<vmem>>, %arg4: memref<64x192xbf16, #tpu.memory_space<vmem>>, %arg5: memref<1x192xf32, #tpu.memory_space<vmem>>, %arg6: memref<16x64xbf16, #tpu.memory_space<vmem>>, %arg7: memref<16x64xbf16, #tpu.memory_space<vmem>>, %arg8: memref<16x64xbf16, #tpu.memory_space<vmem>>) attributes {dimension_semantics = [#tpu.dimension_semantics<parallel>], iteration_bounds = array<i64: 1>, scalar_prefetch = 0 : i64, scratch_operands = 0 : i64, tpu.core_type = #tpu.core_type<tc>, window_params = [{transform_indices = @transform_0, window_bounds = array<i64: 16, 64>}, {pipeline_mode = #tpu.pipeline_mode<synchronous>, transform_indices = @transform_1, window_bounds = array<i64: 1, 64>}, {pipeline_mode = #tpu.pipeline_mode<synchronous>, transform_indices = @transform_2, window_bounds = array<i64: 1, 64>}, {pipeline_mode = #tpu.pipeline_mode<synchronous>, transform_indices = @transform_3, window_bounds = array<i64: 64, 192>}, {pipeline_mode = #tpu.pipeline_mode<synchronous>, transform_indices = @transform_4, window_bounds = array<i64: 1, 192>}, {transform_indices = @transform_5, window_bounds = array<i64: 16, 64>}, {transform_indices = @transform_6, window_bounds = array<i64: 16, 64>}, {transform_indices = @transform_7, window_bounds = array<i64: 16, 64>}]} {
    %c0 = arith.constant 0 : index
    %c0_0 = arith.constant 0 : index
    %0 = vector.load %arg1[%c0, %c0_0] : memref<16x64xf32, #tpu.memory_space<vmem>>, vector<16x64xf32>
    %c0_1 = arith.constant 0 : index
    %c0_2 = arith.constant 0 : index
    %1 = vector.load %arg2[%c0_1, %c0_2] : memref<1x64xf32, #tpu.memory_space<vmem>>, vector<1x64xf32>
    %c0_3 = arith.constant 0 : index
    %c0_4 = arith.constant 0 : index
    %2 = vector.load %arg3[%c0_3, %c0_4] : memref<1x64xf32, #tpu.memory_space<vmem>>, vector<1x64xf32>
    %cst = arith.constant dense<0.000000e+00> : vector<16xf32>
    %3 = vector.multi_reduction <add>, %0, %cst [1] : vector<16x64xf32> to vector<16xf32>
    %4 = vector.shape_cast %3 : vector<16xf32> to vector<16x1xf32>
    %cst_5 = arith.constant 6.400000e+01 : f32
    %5 = vector.broadcast %cst_5 : f32 to vector<16x1xf32>
    %6 = arith.divf %4, %5 : vector<16x1xf32>
    %7 = vector.broadcast %6 : vector<16x1xf32> to vector<16x64xf32>
    %8 = arith.subf %0, %7 : vector<16x64xf32>
    %9 = arith.mulf %8, %8 : vector<16x64xf32>
    %cst_6 = arith.constant dense<0.000000e+00> : vector<16xf32>
    %10 = vector.multi_reduction <add>, %9, %cst_6 [1] : vector<16x64xf32> to vector<16xf32>
    %11 = vector.shape_cast %10 : vector<16xf32> to vector<16x1xf32>
    %cst_7 = arith.constant 6.400000e+01 : f32
    %12 = vector.broadcast %cst_7 : f32 to vector<16x1xf32>
    %13 = arith.divf %11, %12 : vector<16x1xf32>
    %14 = vector.broadcast %6 : vector<16x1xf32> to vector<16x64xf32>
    %15 = arith.subf %0, %14 : vector<16x64xf32>
    %cst_8 = arith.constant 9.99999974E-6 : f32
    %16 = vector.broadcast %cst_8 : f32 to vector<16x1xf32>
    %17 = arith.addf %13, %16 : vector<16x1xf32>
    %18 = math.rsqrt %17 : vector<16x1xf32>
    %19 = vector.broadcast %18 : vector<16x1xf32> to vector<16x64xf32>
    %20 = arith.mulf %15, %19 : vector<16x64xf32>
    %21 = vector.broadcast %1 : vector<1x64xf32> to vector<16x64xf32>
    %22 = arith.mulf %20, %21 : vector<16x64xf32>
    %23 = vector.broadcast %2 : vector<1x64xf32> to vector<16x64xf32>
    %24 = arith.addf %22, %23 : vector<16x64xf32>
    %25 = arith.truncf %24 : vector<16x64xf32> to vector<16x64xbf16>
    %c0_9 = arith.constant 0 : index
    %c0_10 = arith.constant 0 : index
    %26 = vector.load %arg4[%c0_9, %c0_10] : memref<64x192xbf16, #tpu.memory_space<vmem>>, vector<64x192xbf16>
    %cst_11 = arith.constant dense<0.000000e+00> : vector<16x192xf32>
    %27 = tpu.matmul %25, %26, %cst_11 {dimension_numbers = #tpu.dot_dimension_numbers<[1], [0], [0], [1], [0, 0, 1, 1], [], []>} : vector<16x64xbf16>, vector<64x192xbf16>, vector<16x192xf32> -> vector<16x192xf32>
    %c0_12 = arith.constant 0 : index
    %c0_13 = arith.constant 0 : index
    %28 = vector.load %arg5[%c0_12, %c0_13] : memref<1x192xf32, #tpu.memory_space<vmem>>, vector<1x192xf32>
    %29 = vector.broadcast %28 : vector<1x192xf32> to vector<16x192xf32>
    %30 = arith.addf %27, %29 : vector<16x192xf32>
    %31 = vector.extract_strided_slice %30 {offsets = [0, 0], sizes = [16, 64], strides = [1, 1]} : vector<16x192xf32> to vector<16x64xf32>
    %cst_14 = arith.constant 2.500000e-01 : f32
    %32 = vector.broadcast %cst_14 : f32 to vector<16x64xf32>
    %33 = arith.mulf %31, %32 : vector<16x64xf32>
    %34 = arith.truncf %33 : vector<16x64xf32> to vector<16x64xbf16>
    %c0_15 = arith.constant 0 : index
    %c0_16 = arith.constant 0 : index
    %35 = vector.load %arg6[%c0_15, %c0_16] : memref<16x64xbf16, #tpu.memory_space<vmem>>, vector<16x64xbf16>
    tpu.vector_store %arg6[%c0_15, %c0_16], %34 {strides = array<i32>} : memref<16x64xbf16, #tpu.memory_space<vmem>>, vector<16x64xbf16>,
    %36 = vector.extract_strided_slice %30 {offsets = [0, 64], sizes = [16, 64], strides = [1, 1]} : vector<16x192xf32> to vector<16x64xf32>
    %37 = arith.truncf %36 : vector<16x64xf32> to vector<16x64xbf16>
    %c0_17 = arith.constant 0 : index
    %c0_18 = arith.constant 0 : index
    %38 = vector.load %arg7[%c0_17, %c0_18] : memref<16x64xbf16, #tpu.memory_space<vmem>>, vector<16x64xbf16>
    tpu.vector_store %arg7[%c0_17, %c0_18], %37 {strides = array<i32>} : memref<16x64xbf16, #tpu.memory_space<vmem>>, vector<16x64xbf16>,
    %39 = vector.extract_strided_slice %30 {offsets = [0, 128], sizes = [16, 64], strides = [1, 1]} : vector<16x192xf32> to vector<16x64xf32>
    %40 = arith.truncf %39 : vector<16x64xf32> to vector<16x64xbf16>
    %c0_19 = arith.constant 0 : index
    %c0_20 = arith.constant 0 : index
    %41 = vector.load %arg8[%c0_19, %c0_20] : memref<16x64xbf16, #tpu.memory_space<vmem>>, vector<16x64xbf16>
    tpu.vector_store %arg8[%c0_19, %c0_20], %40 {strides = array<i32>} : memref<16x64xbf16, #tpu.memory_space<vmem>>, vector<16x64xbf16>,
    return
  }
  func.func @transform_0(%arg0: i32) -> (i32, i32) {
    %c0_i32 = arith.constant 0 : i32
    %c0_i32_0 = arith.constant 0 : i32
    return %arg0, %c0_i32 : i32, i32
  }
  func.func @transform_1(%arg0: i32) -> (i32, i32) {
    %c0_i32 = arith.constant 0 : i32
    %c0_i32_0 = arith.constant 0 : i32
    %c0_i32_1 = arith.constant 0 : i32
    return %c0_i32, %c0_i32_0 : i32, i32
  }
  func.func @transform_2(%arg0: i32) -> (i32, i32) {
    %c0_i32 = arith.constant 0 : i32
    %c0_i32_0 = arith.constant 0 : i32
    %c0_i32_1 = arith.constant 0 : i32
    return %c0_i32, %c0_i32_0 : i32, i32
  }
  func.func @transform_3(%arg0: i32) -> (i32, i32) {
    %c0_i32 = arith.constant 0 : i32
    %c0_i32_0 = arith.constant 0 : i32
    %c0_i32_1 = arith.constant 0 : i32
    return %c0_i32, %c0_i32_0 : i32, i32
  }
  func.func @transform_4(%arg0: i32) -> (i32, i32) {
    %c0_i32 = arith.constant 0 : i32
    %c0_i32_0 = arith.constant 0 : i32
    %c0_i32_1 = arith.constant 0 : i32
    return %c0_i32, %c0_i32_0 : i32, i32
  }
  func.func @transform_5(%arg0: i32) -> (i32, i32) {
    %c0_i32 = arith.constant 0 : i32
    %c0_i32_0 = arith.constant 0 : i32
    return %arg0, %c0_i32 : i32, i32
  }
  func.func @transform_6(%arg0: i32) -> (i32, i32) {
    %c0_i32 = arith.constant 0 : i32
    %c0_i32_0 = arith.constant 0 : i32
    return %arg0, %c0_i32 : i32, i32
  }
  func.func @transform_7(%arg0: i32) -> (i32, i32) {
    %c0_i32 = arith.constant 0 : i32
    %c0_i32_0 = arith.constant 0 : i32
    return %arg0, %c0_i32 : i32, i32
  }
}

module attributes {stable_mosaic.version = 11 : i64} {
  func.func @_proj_ln2_fc_kernel(%arg0: i32, %arg1: memref<16x64xf32, #tpu.memory_space<vmem>>, %arg2: memref<16x64xbf16, #tpu.memory_space<vmem>>, %arg3: memref<64x64xbf16, #tpu.memory_space<vmem>>, %arg4: memref<1x64xf32, #tpu.memory_space<vmem>>, %arg5: memref<1x64xf32, #tpu.memory_space<vmem>>, %arg6: memref<1x64xf32, #tpu.memory_space<vmem>>, %arg7: memref<64x256xbf16, #tpu.memory_space<vmem>>, %arg8: memref<1x256xf32, #tpu.memory_space<vmem>>, %arg9: memref<16x64xf32, #tpu.memory_space<vmem>>, %arg10: memref<16x256xbf16, #tpu.memory_space<vmem>>) attributes {dimension_semantics = [#tpu.dimension_semantics<parallel>], iteration_bounds = array<i64: 1>, scalar_prefetch = 0 : i64, scratch_operands = 0 : i64, tpu.core_type = #tpu.core_type<tc>, window_params = [{transform_indices = @transform_0, window_bounds = array<i64: 16, 64>}, {transform_indices = @transform_1, window_bounds = array<i64: 16, 64>}, {pipeline_mode = #tpu.pipeline_mode<synchronous>, transform_indices = @transform_2, window_bounds = array<i64: 64, 64>}, {pipeline_mode = #tpu.pipeline_mode<synchronous>, transform_indices = @transform_3, window_bounds = array<i64: 1, 64>}, {pipeline_mode = #tpu.pipeline_mode<synchronous>, transform_indices = @transform_4, window_bounds = array<i64: 1, 64>}, {pipeline_mode = #tpu.pipeline_mode<synchronous>, transform_indices = @transform_5, window_bounds = array<i64: 1, 64>}, {pipeline_mode = #tpu.pipeline_mode<synchronous>, transform_indices = @transform_6, window_bounds = array<i64: 64, 256>}, {pipeline_mode = #tpu.pipeline_mode<synchronous>, transform_indices = @transform_7, window_bounds = array<i64: 1, 256>}, {transform_indices = @transform_8, window_bounds = array<i64: 16, 64>}, {transform_indices = @transform_9, window_bounds = array<i64: 16, 256>}]} {
    %c0 = arith.constant 0 : index
    %c0_0 = arith.constant 0 : index
    %0 = vector.load %arg1[%c0, %c0_0] : memref<16x64xf32, #tpu.memory_space<vmem>>, vector<16x64xf32>
    %c0_1 = arith.constant 0 : index
    %c0_2 = arith.constant 0 : index
    %1 = vector.load %arg2[%c0_1, %c0_2] : memref<16x64xbf16, #tpu.memory_space<vmem>>, vector<16x64xbf16>
    %c0_3 = arith.constant 0 : index
    %c0_4 = arith.constant 0 : index
    %2 = vector.load %arg3[%c0_3, %c0_4] : memref<64x64xbf16, #tpu.memory_space<vmem>>, vector<64x64xbf16>
    %cst = arith.constant dense<0.000000e+00> : vector<16x64xf32>
    %3 = tpu.matmul %1, %2, %cst {dimension_numbers = #tpu.dot_dimension_numbers<[1], [0], [0], [1], [0, 0, 1, 1], [], []>} : vector<16x64xbf16>, vector<64x64xbf16>, vector<16x64xf32> -> vector<16x64xf32>
    %c0_5 = arith.constant 0 : index
    %c0_6 = arith.constant 0 : index
    %4 = vector.load %arg4[%c0_5, %c0_6] : memref<1x64xf32, #tpu.memory_space<vmem>>, vector<1x64xf32>
    %5 = vector.broadcast %4 : vector<1x64xf32> to vector<16x64xf32>
    %6 = arith.addf %3, %5 : vector<16x64xf32>
    %7 = arith.addf %0, %6 : vector<16x64xf32>
    %c0_7 = arith.constant 0 : index
    %c0_8 = arith.constant 0 : index
    %8 = vector.load %arg9[%c0_7, %c0_8] : memref<16x64xf32, #tpu.memory_space<vmem>>, vector<16x64xf32>
    tpu.vector_store %arg9[%c0_7, %c0_8], %7 {strides = array<i32>} : memref<16x64xf32, #tpu.memory_space<vmem>>, vector<16x64xf32>,
    %c0_9 = arith.constant 0 : index
    %c0_10 = arith.constant 0 : index
    %9 = vector.load %arg5[%c0_9, %c0_10] : memref<1x64xf32, #tpu.memory_space<vmem>>, vector<1x64xf32>
    %c0_11 = arith.constant 0 : index
    %c0_12 = arith.constant 0 : index
    %10 = vector.load %arg6[%c0_11, %c0_12] : memref<1x64xf32, #tpu.memory_space<vmem>>, vector<1x64xf32>
    %cst_13 = arith.constant dense<0.000000e+00> : vector<16xf32>
    %11 = vector.multi_reduction <add>, %7, %cst_13 [1] : vector<16x64xf32> to vector<16xf32>
    %12 = vector.shape_cast %11 : vector<16xf32> to vector<16x1xf32>
    %cst_14 = arith.constant 6.400000e+01 : f32
    %13 = vector.broadcast %cst_14 : f32 to vector<16x1xf32>
    %14 = arith.divf %12, %13 : vector<16x1xf32>
    %15 = vector.broadcast %14 : vector<16x1xf32> to vector<16x64xf32>
    %16 = arith.subf %7, %15 : vector<16x64xf32>
    %17 = arith.mulf %16, %16 : vector<16x64xf32>
    %cst_15 = arith.constant dense<0.000000e+00> : vector<16xf32>
    %18 = vector.multi_reduction <add>, %17, %cst_15 [1] : vector<16x64xf32> to vector<16xf32>
    %19 = vector.shape_cast %18 : vector<16xf32> to vector<16x1xf32>
    %cst_16 = arith.constant 6.400000e+01 : f32
    %20 = vector.broadcast %cst_16 : f32 to vector<16x1xf32>
    %21 = arith.divf %19, %20 : vector<16x1xf32>
    %22 = vector.broadcast %14 : vector<16x1xf32> to vector<16x64xf32>
    %23 = arith.subf %7, %22 : vector<16x64xf32>
    %cst_17 = arith.constant 9.99999974E-6 : f32
    %24 = vector.broadcast %cst_17 : f32 to vector<16x1xf32>
    %25 = arith.addf %21, %24 : vector<16x1xf32>
    %26 = math.rsqrt %25 : vector<16x1xf32>
    %27 = vector.broadcast %26 : vector<16x1xf32> to vector<16x64xf32>
    %28 = arith.mulf %23, %27 : vector<16x64xf32>
    %29 = vector.broadcast %9 : vector<1x64xf32> to vector<16x64xf32>
    %30 = arith.mulf %28, %29 : vector<16x64xf32>
    %31 = vector.broadcast %10 : vector<1x64xf32> to vector<16x64xf32>
    %32 = arith.addf %30, %31 : vector<16x64xf32>
    %33 = arith.truncf %32 : vector<16x64xf32> to vector<16x64xbf16>
    %c0_18 = arith.constant 0 : index
    %c0_19 = arith.constant 0 : index
    %34 = vector.load %arg7[%c0_18, %c0_19] : memref<64x256xbf16, #tpu.memory_space<vmem>>, vector<64x256xbf16>
    %cst_20 = arith.constant dense<0.000000e+00> : vector<16x256xf32>
    %35 = tpu.matmul %33, %34, %cst_20 {dimension_numbers = #tpu.dot_dimension_numbers<[1], [0], [0], [1], [0, 0, 1, 1], [], []>} : vector<16x64xbf16>, vector<64x256xbf16>, vector<16x256xf32> -> vector<16x256xf32>
    %c0_21 = arith.constant 0 : index
    %c0_22 = arith.constant 0 : index
    %36 = vector.load %arg8[%c0_21, %c0_22] : memref<1x256xf32, #tpu.memory_space<vmem>>, vector<1x256xf32>
    %37 = vector.broadcast %36 : vector<1x256xf32> to vector<16x256xf32>
    %38 = arith.addf %35, %37 : vector<16x256xf32>
    %cst_23 = arith.constant -1.702000e+00 : f32
    %39 = vector.broadcast %cst_23 : f32 to vector<16x256xf32>
    %40 = arith.mulf %39, %38 : vector<16x256xf32>
    %41 = math.exp %40 : vector<16x256xf32>
    %cst_24 = arith.constant 1.000000e+00 : f32
    %42 = vector.broadcast %cst_24 : f32 to vector<16x256xf32>
    %43 = arith.addf %42, %41 : vector<16x256xf32>
    %cst_25 = arith.constant 1.000000e+00 : f32
    %44 = vector.broadcast %cst_25 : f32 to vector<16x256xf32>
    %45 = arith.divf %44, %43 : vector<16x256xf32>
    %46 = arith.mulf %38, %45 : vector<16x256xf32>
    %47 = arith.truncf %46 : vector<16x256xf32> to vector<16x256xbf16>
    %c0_26 = arith.constant 0 : index
    %c0_27 = arith.constant 0 : index
    %48 = vector.load %arg10[%c0_26, %c0_27] : memref<16x256xbf16, #tpu.memory_space<vmem>>, vector<16x256xbf16>
    tpu.vector_store %arg10[%c0_26, %c0_27], %47 {strides = array<i32>} : memref<16x256xbf16, #tpu.memory_space<vmem>>, vector<16x256xbf16>,
    return
  }
  func.func @transform_0(%arg0: i32) -> (i32, i32) {
    %c0_i32 = arith.constant 0 : i32
    %c0_i32_0 = arith.constant 0 : i32
    return %arg0, %c0_i32 : i32, i32
  }
  func.func @transform_1(%arg0: i32) -> (i32, i32) {
    %c0_i32 = arith.constant 0 : i32
    %c0_i32_0 = arith.constant 0 : i32
    return %arg0, %c0_i32 : i32, i32
  }
  func.func @transform_2(%arg0: i32) -> (i32, i32) {
    %c0_i32 = arith.constant 0 : i32
    %c0_i32_0 = arith.constant 0 : i32
    %c0_i32_1 = arith.constant 0 : i32
    return %c0_i32, %c0_i32_0 : i32, i32
  }
  func.func @transform_3(%arg0: i32) -> (i32, i32) {
    %c0_i32 = arith.constant 0 : i32
    %c0_i32_0 = arith.constant 0 : i32
    %c0_i32_1 = arith.constant 0 : i32
    return %c0_i32, %c0_i32_0 : i32, i32
  }
  func.func @transform_4(%arg0: i32) -> (i32, i32) {
    %c0_i32 = arith.constant 0 : i32
    %c0_i32_0 = arith.constant 0 : i32
    %c0_i32_1 = arith.constant 0 : i32
    return %c0_i32, %c0_i32_0 : i32, i32
  }
  func.func @transform_5(%arg0: i32) -> (i32, i32) {
    %c0_i32 = arith.constant 0 : i32
    %c0_i32_0 = arith.constant 0 : i32
    %c0_i32_1 = arith.constant 0 : i32
    return %c0_i32, %c0_i32_0 : i32, i32
  }
  func.func @transform_6(%arg0: i32) -> (i32, i32) {
    %c0_i32 = arith.constant 0 : i32
    %c0_i32_0 = arith.constant 0 : i32
    %c0_i32_1 = arith.constant 0 : i32
    return %c0_i32, %c0_i32_0 : i32, i32
  }
  func.func @transform_7(%arg0: i32) -> (i32, i32) {
    %c0_i32 = arith.constant 0 : i32
    %c0_i32_0 = arith.constant 0 : i32
    %c0_i32_1 = arith.constant 0 : i32
    return %c0_i32, %c0_i32_0 : i32, i32
  }
  func.func @transform_8(%arg0: i32) -> (i32, i32) {
    %c0_i32 = arith.constant 0 : i32
    %c0_i32_0 = arith.constant 0 : i32
    return %arg0, %c0_i32 : i32, i32
  }
  func.func @transform_9(%arg0: i32) -> (i32, i32) {
    %c0_i32 = arith.constant 0 : i32
    %c0_i32_0 = arith.constant 0 : i32
    return %arg0, %c0_i32 : i32, i32
  }
}

module attributes {stable_mosaic.version = 11 : i64} {
  func.func @_flash_attn_kernel(%arg0: i32, %arg1: i32, %arg2: i32, %arg3: memref<1x8x64xbf16, #tpu.memory_space<vmem>>, %arg4: memref<1x8x64xbf16, #tpu.memory_space<vmem>>, %arg5: memref<1x8x64xbf16, #tpu.memory_space<vmem>>, %arg6: memref<1x8x64xbf16, #tpu.memory_space<vmem>>, %arg7: memref<4x8x1xf32, #tpu.memory_space<vmem>>, %arg8: memref<4x8x1xf32, #tpu.memory_space<vmem>>, %arg9: memref<4x8x16xf32, #tpu.memory_space<vmem>>) attributes {dimension_semantics = [#tpu.dimension_semantics<parallel>, #tpu.dimension_semantics<parallel>, #tpu.dimension_semantics<arbitrary>], iteration_bounds = array<i64: 2, 1, 1>, scalar_prefetch = 0 : i64, scratch_operands = 3 : i64, tpu.core_type = #tpu.core_type<tc>, window_params = [{transform_indices = @transform_0, window_bounds = array<i64: 1, 8, 64>}, {transform_indices = @transform_1, window_bounds = array<i64: 1, 8, 64>}, {transform_indices = @transform_2, window_bounds = array<i64: 1, 8, 64>}, {transform_indices = @transform_3, window_bounds = array<i64: 1, 8, 64>}]} {
    %c0_i32 = arith.constant 0 : i32
    %0 = arith.cmpi eq, %arg2, %c0_i32 : i32
    %1 = arith.extui %0 : i1 to i32
    %c0_i32_0 = arith.constant 0 : i32
    %2 = arith.cmpi ne, %1, %c0_i32_0 : i32
    scf.if %2 {
      %cst_32 = arith.constant 0xFF800000 : f32
      %45 = vector.broadcast %cst_32 : f32 to vector<4x8x1xf32>
      %c0_33 = arith.constant 0 : index
      %c0_34 = arith.constant 0 : index
      %c0_35 = arith.constant 0 : index
      %46 = vector.load %arg7[%c0_33, %c0_34, %c0_35] : memref<4x8x1xf32, #tpu.memory_space<vmem>>, vector<4x8x1xf32>
      tpu.vector_store %arg7[%c0_33, %c0_34, %c0_35], %45 {strides = array<i32>} : memref<4x8x1xf32, #tpu.memory_space<vmem>>, vector<4x8x1xf32>,
      %cst_36 = arith.constant 0.000000e+00 : f32
      %47 = vector.broadcast %cst_36 : f32 to vector<4x8x1xf32>
      %c0_37 = arith.constant 0 : index
      %c0_38 = arith.constant 0 : index
      %c0_39 = arith.constant 0 : index
      %48 = vector.load %arg8[%c0_37, %c0_38, %c0_39] : memref<4x8x1xf32, #tpu.memory_space<vmem>>, vector<4x8x1xf32>
      tpu.vector_store %arg8[%c0_37, %c0_38, %c0_39], %47 {strides = array<i32>} : memref<4x8x1xf32, #tpu.memory_space<vmem>>, vector<4x8x1xf32>,
      %cst_40 = arith.constant 0.000000e+00 : f32
      %49 = vector.broadcast %cst_40 : f32 to vector<4x8x16xf32>
      %c0_41 = arith.constant 0 : index
      %c0_42 = arith.constant 0 : index
      %c0_43 = arith.constant 0 : index
      %50 = vector.load %arg9[%c0_41, %c0_42, %c0_43] : memref<4x8x16xf32, #tpu.memory_space<vmem>>, vector<4x8x16xf32>
      tpu.vector_store %arg9[%c0_41, %c0_42, %c0_43], %49 {strides = array<i32>} : memref<4x8x16xf32, #tpu.memory_space<vmem>>, vector<4x8x16xf32>,
    } else {
    }
    %c0 = arith.constant 0 : index
    %c0_1 = arith.constant 0 : index
    %c0_2 = arith.constant 0 : index
    %3 = vector.load %arg3[%c0, %c0_1, %c0_2] : memref<1x8x64xbf16, #tpu.memory_space<vmem>>, vector<1x8x64xbf16>
    %4 = arith.extf %3 : vector<1x8x64xbf16> to vector<1x8x64xf32>
    %5 = vector.shape_cast %4 : vector<1x8x64xf32> to vector<8x4x16xf32>
    %6 = tpu.transpose %5, [1, 0, 2] : vector<8x4x16xf32> -> vector<4x8x16xf32>
    %c0_3 = arith.constant 0 : index
    %c0_4 = arith.constant 0 : index
    %c0_5 = arith.constant 0 : index
    %7 = vector.load %arg4[%c0_3, %c0_4, %c0_5] : memref<1x8x64xbf16, #tpu.memory_space<vmem>>, vector<1x8x64xbf16>
    %8 = arith.extf %7 : vector<1x8x64xbf16> to vector<1x8x64xf32>
    %9 = vector.shape_cast %8 : vector<1x8x64xf32> to vector<8x4x16xf32>
    %10 = tpu.transpose %9, [1, 0, 2] : vector<8x4x16xf32> -> vector<4x8x16xf32>
    %c0_6 = arith.constant 0 : index
    %c0_7 = arith.constant 0 : index
    %c0_8 = arith.constant 0 : index
    %11 = vector.load %arg5[%c0_6, %c0_7, %c0_8] : memref<1x8x64xbf16, #tpu.memory_space<vmem>>, vector<1x8x64xbf16>
    %12 = arith.extf %11 : vector<1x8x64xbf16> to vector<1x8x64xf32>
    %13 = vector.shape_cast %12 : vector<1x8x64xf32> to vector<8x4x16xf32>
    %14 = tpu.transpose %13, [1, 0, 2] : vector<8x4x16xf32> -> vector<4x8x16xf32>
    %15 = arith.truncf %6 : vector<4x8x16xf32> to vector<4x8x16xbf16>
    %16 = arith.truncf %10 : vector<4x8x16xf32> to vector<4x8x16xbf16>
    %17 = arith.truncf %14 : vector<4x8x16xf32> to vector<4x8x16xbf16>
    "tpu.trace_start"() <{level = 10 : i32, message = "hqd,hkd->hqk"}> : () -> ()
    %cst = arith.constant dense<0.000000e+00> : vector<4x8x8xf32>
    %18 = tpu.matmul %15, %16, %cst {dimension_numbers = #tpu.dot_dimension_numbers<[2], [2], [1], [1], [0, 0, 0, 1, 1, 1], [0], [0]>} : vector<4x8x16xbf16>, vector<4x8x16xbf16>, vector<4x8x8xf32> -> vector<4x8x8xf32>
    "tpu.trace_stop"() : () -> ()
    %c0_9 = arith.constant 0 : index
    %c0_10 = arith.constant 0 : index
    %c0_11 = arith.constant 0 : index
    %19 = vector.load %arg7[%c0_9, %c0_10, %c0_11] : memref<4x8x1xf32, #tpu.memory_space<vmem>>, vector<4x8x1xf32>
    %cst_12 = arith.constant dense<0xFF800000> : vector<4x8xf32>
    %20 = vector.multi_reduction <maximumf>, %18, %cst_12 [2] : vector<4x8x8xf32> to vector<4x8xf32>
    %21 = vector.shape_cast %20 : vector<4x8xf32> to vector<4x8x1xf32>
    %22 = arith.maximumf %19, %21 : vector<4x8x1xf32>
    %23 = arith.subf %19, %22 : vector<4x8x1xf32>
    %24 = math.exp %23 : vector<4x8x1xf32>
    %25 = vector.broadcast %22 : vector<4x8x1xf32> to vector<4x8x8xf32>
    %26 = arith.subf %18, %25 : vector<4x8x8xf32>
    %27 = math.exp %26 : vector<4x8x8xf32>
    %c0_13 = arith.constant 0 : index
    %c0_14 = arith.constant 0 : index
    %c0_15 = arith.constant 0 : index
    %28 = vector.load %arg8[%c0_13, %c0_14, %c0_15] : memref<4x8x1xf32, #tpu.memory_space<vmem>>, vector<4x8x1xf32>
    %29 = arith.mulf %24, %28 : vector<4x8x1xf32>
    %cst_16 = arith.constant dense<0.000000e+00> : vector<4x8xf32>
    %30 = vector.multi_reduction <add>, %27, %cst_16 [2] : vector<4x8x8xf32> to vector<4x8xf32>
    %31 = vector.shape_cast %30 : vector<4x8xf32> to vector<4x8x1xf32>
    %32 = arith.addf %29, %31 : vector<4x8x1xf32>
    %c0_17 = arith.constant 0 : index
    %c0_18 = arith.constant 0 : index
    %c0_19 = arith.constant 0 : index
    %33 = vector.load %arg8[%c0_17, %c0_18, %c0_19] : memref<4x8x1xf32, #tpu.memory_space<vmem>>, vector<4x8x1xf32>
    tpu.vector_store %arg8[%c0_17, %c0_18, %c0_19], %32 {strides = array<i32>} : memref<4x8x1xf32, #tpu.memory_space<vmem>>, vector<4x8x1xf32>,
    %c0_20 = arith.constant 0 : index
    %c0_21 = arith.constant 0 : index
    %c0_22 = arith.constant 0 : index
    %34 = vector.load %arg9[%c0_20, %c0_21, %c0_22] : memref<4x8x16xf32, #tpu.memory_space<vmem>>, vector<4x8x16xf32>
    %35 = vector.broadcast %24 : vector<4x8x1xf32> to vector<4x8x16xf32>
    %36 = arith.mulf %35, %34 : vector<4x8x16xf32>
    %37 = arith.truncf %27 : vector<4x8x8xf32> to vector<4x8x8xbf16>
    "tpu.trace_start"() <{level = 10 : i32, message = "hqk,hkd->hqd"}> : () -> ()
    %cst_23 = arith.constant dense<0.000000e+00> : vector<4x8x16xf32>
    %38 = tpu.matmul %37, %17, %cst_23 {dimension_numbers = #tpu.dot_dimension_numbers<[2], [1], [1], [2], [0, 0, 0, 1, 1, 2], [0], [0]>} : vector<4x8x8xbf16>, vector<4x8x16xbf16>, vector<4x8x16xf32> -> vector<4x8x16xf32>
    "tpu.trace_stop"() : () -> ()
    %39 = arith.addf %36, %38 : vector<4x8x16xf32>
    %c0_24 = arith.constant 0 : index
    %c0_25 = arith.constant 0 : index
    %c0_26 = arith.constant 0 : index
    %40 = vector.load %arg9[%c0_24, %c0_25, %c0_26] : memref<4x8x16xf32, #tpu.memory_space<vmem>>, vector<4x8x16xf32>
    tpu.vector_store %arg9[%c0_24, %c0_25, %c0_26], %39 {strides = array<i32>} : memref<4x8x16xf32, #tpu.memory_space<vmem>>, vector<4x8x16xf32>,
    %c0_27 = arith.constant 0 : index
    %c0_28 = arith.constant 0 : index
    %c0_29 = arith.constant 0 : index
    %41 = vector.load %arg7[%c0_27, %c0_28, %c0_29] : memref<4x8x1xf32, #tpu.memory_space<vmem>>, vector<4x8x1xf32>
    tpu.vector_store %arg7[%c0_27, %c0_28, %c0_29], %22 {strides = array<i32>} : memref<4x8x1xf32, #tpu.memory_space<vmem>>, vector<4x8x1xf32>,
    %c0_i32_30 = arith.constant 0 : i32
    %42 = arith.cmpi eq, %arg2, %c0_i32_30 : i32
    %43 = arith.extui %42 : i1 to i32
    %c0_i32_31 = arith.constant 0 : i32
    %44 = arith.cmpi ne, %43, %c0_i32_31 : i32
    scf.if %44 {
      %c0_32 = arith.constant 0 : index
      %c0_33 = arith.constant 0 : index
      %c0_34 = arith.constant 0 : index
      %45 = vector.load %arg9[%c0_32, %c0_33, %c0_34] : memref<4x8x16xf32, #tpu.memory_space<vmem>>, vector<4x8x16xf32>
      %c0_35 = arith.constant 0 : index
      %c0_36 = arith.constant 0 : index
      %c0_37 = arith.constant 0 : index
      %46 = vector.load %arg8[%c0_35, %c0_36, %c0_37] : memref<4x8x1xf32, #tpu.memory_space<vmem>>, vector<4x8x1xf32>
      %47 = tpu.reciprocal %46 {approx = true} : vector<4x8x1xf32> -> vector<4x8x1xf32>
      %48 = vector.broadcast %47 : vector<4x8x1xf32> to vector<4x8x16xf32>
      %49 = arith.mulf %45, %48 : vector<4x8x16xf32>
      %50 = tpu.transpose %49, [1, 0, 2] : vector<4x8x16xf32> -> vector<8x4x16xf32>
      %51 = vector.shape_cast %50 : vector<8x4x16xf32> to vector<1x8x64xf32>
      %52 = arith.truncf %51 : vector<1x8x64xf32> to vector<1x8x64xbf16>
      %c0_38 = arith.constant 0 : index
      %c0_39 = arith.constant 0 : index
      %c0_40 = arith.constant 0 : index
      %53 = vector.load %arg6[%c0_38, %c0_39, %c0_40] : memref<1x8x64xbf16, #tpu.memory_space<vmem>>, vector<1x8x64xbf16>
      tpu.vector_store %arg6[%c0_38, %c0_39, %c0_40], %52 {strides = array<i32>} : memref<1x8x64xbf16, #tpu.memory_space<vmem>>, vector<1x8x64xbf16>,
    } else {
    }
    return
  }
  func.func @transform_0(%arg0: i32, %arg1: i32, %arg2: i32) -> (i32, i32, i32) {
    %c0_i32 = arith.constant 0 : i32
    %c0_i32_0 = arith.constant 0 : i32
    return %arg0, %arg1, %c0_i32 : i32, i32, i32
  }
  func.func @transform_1(%arg0: i32, %arg1: i32, %arg2: i32) -> (i32, i32, i32) {
    %c0_i32 = arith.constant 0 : i32
    %c0_i32_0 = arith.constant 0 : i32
    return %arg0, %arg2, %c0_i32 : i32, i32, i32
  }
  func.func @transform_2(%arg0: i32, %arg1: i32, %arg2: i32) -> (i32, i32, i32) {
    %c0_i32 = arith.constant 0 : i32
    %c0_i32_0 = arith.constant 0 : i32
    return %arg0, %arg2, %c0_i32 : i32, i32, i32
  }
  func.func @transform_3(%arg0: i32, %arg1: i32, %arg2: i32) -> (i32, i32, i32) {
    %c0_i32 = arith.constant 0 : i32
    %c0_i32_0 = arith.constant 0 : i32
    return %arg0, %arg1, %c0_i32 : i32, i32, i32
  }
}

module attributes {stable_mosaic.version = 11 : i64} {
  func.func @_cproj_residual_kernel(%arg0: i32, %arg1: i32, %arg2: memref<16x256xbf16, #tpu.memory_space<vmem>>, %arg3: memref<256x64xbf16, #tpu.memory_space<vmem>>, %arg4: memref<1x64xf32, #tpu.memory_space<vmem>>, %arg5: memref<16x64xf32, #tpu.memory_space<vmem>>, %arg6: memref<16x64xf32, #tpu.memory_space<vmem>>, %arg7: memref<16x64xf32, #tpu.memory_space<vmem>>) attributes {dimension_semantics = [#tpu.dimension_semantics<parallel>, #tpu.dimension_semantics<arbitrary>], iteration_bounds = array<i64: 1, 1>, scalar_prefetch = 0 : i64, scratch_operands = 1 : i64, tpu.core_type = #tpu.core_type<tc>, window_params = [{transform_indices = @transform_0, window_bounds = array<i64: 16, 256>}, {transform_indices = @transform_1, window_bounds = array<i64: 256, 64>}, {pipeline_mode = #tpu.pipeline_mode<synchronous>, transform_indices = @transform_2, window_bounds = array<i64: 1, 64>}, {transform_indices = @transform_3, window_bounds = array<i64: 16, 64>}, {transform_indices = @transform_4, window_bounds = array<i64: 16, 64>}]} {
    %c0_i32 = arith.constant 0 : i32
    %0 = arith.cmpi eq, %arg1, %c0_i32 : i32
    %1 = arith.extui %0 : i1 to i32
    %c0_i32_0 = arith.constant 0 : i32
    %2 = arith.cmpi ne, %1, %c0_i32_0 : i32
    scf.if %2 {
      %cst_10 = arith.constant 0.000000e+00 : f32
      %12 = vector.broadcast %cst_10 : f32 to vector<16x64xf32>
      %c0_11 = arith.constant 0 : index
      %c0_12 = arith.constant 0 : index
      %13 = vector.load %arg7[%c0_11, %c0_12] : memref<16x64xf32, #tpu.memory_space<vmem>>, vector<16x64xf32>
      tpu.vector_store %arg7[%c0_11, %c0_12], %12 {strides = array<i32>} : memref<16x64xf32, #tpu.memory_space<vmem>>, vector<16x64xf32>,
    } else {
    }
    %c0 = arith.constant 0 : index
    %c0_1 = arith.constant 0 : index
    %3 = vector.load %arg7[%c0, %c0_1] : memref<16x64xf32, #tpu.memory_space<vmem>>, vector<16x64xf32>
    %c0_2 = arith.constant 0 : index
    %c0_3 = arith.constant 0 : index
    %4 = vector.load %arg2[%c0_2, %c0_3] : memref<16x256xbf16, #tpu.memory_space<vmem>>, vector<16x256xbf16>
    %c0_4 = arith.constant 0 : index
    %c0_5 = arith.constant 0 : index
    %5 = vector.load %arg3[%c0_4, %c0_5] : memref<256x64xbf16, #tpu.memory_space<vmem>>, vector<256x64xbf16>
    %cst = arith.constant dense<0.000000e+00> : vector<16x64xf32>
    %6 = tpu.matmul %4, %5, %cst {dimension_numbers = #tpu.dot_dimension_numbers<[1], [0], [0], [1], [0, 0, 1, 1], [], []>} : vector<16x256xbf16>, vector<256x64xbf16>, vector<16x64xf32> -> vector<16x64xf32>
    %7 = arith.addf %3, %6 : vector<16x64xf32>
    %c0_6 = arith.constant 0 : index
    %c0_7 = arith.constant 0 : index
    %8 = vector.load %arg7[%c0_6, %c0_7] : memref<16x64xf32, #tpu.memory_space<vmem>>, vector<16x64xf32>
    tpu.vector_store %arg7[%c0_6, %c0_7], %7 {strides = array<i32>} : memref<16x64xf32, #tpu.memory_space<vmem>>, vector<16x64xf32>,
    %c0_i32_8 = arith.constant 0 : i32
    %9 = arith.cmpi eq, %arg1, %c0_i32_8 : i32
    %10 = arith.extui %9 : i1 to i32
    %c0_i32_9 = arith.constant 0 : i32
    %11 = arith.cmpi ne, %10, %c0_i32_9 : i32
    scf.if %11 {
      %c0_10 = arith.constant 0 : index
      %c0_11 = arith.constant 0 : index
      %12 = vector.load %arg7[%c0_10, %c0_11] : memref<16x64xf32, #tpu.memory_space<vmem>>, vector<16x64xf32>
      %c0_12 = arith.constant 0 : index
      %c0_13 = arith.constant 0 : index
      %13 = vector.load %arg4[%c0_12, %c0_13] : memref<1x64xf32, #tpu.memory_space<vmem>>, vector<1x64xf32>
      %14 = vector.broadcast %13 : vector<1x64xf32> to vector<16x64xf32>
      %15 = arith.addf %12, %14 : vector<16x64xf32>
      %c0_14 = arith.constant 0 : index
      %c0_15 = arith.constant 0 : index
      %16 = vector.load %arg5[%c0_14, %c0_15] : memref<16x64xf32, #tpu.memory_space<vmem>>, vector<16x64xf32>
      %17 = arith.addf %15, %16 : vector<16x64xf32>
      %c0_16 = arith.constant 0 : index
      %c0_17 = arith.constant 0 : index
      %18 = vector.load %arg6[%c0_16, %c0_17] : memref<16x64xf32, #tpu.memory_space<vmem>>, vector<16x64xf32>
      tpu.vector_store %arg6[%c0_16, %c0_17], %17 {strides = array<i32>} : memref<16x64xf32, #tpu.memory_space<vmem>>, vector<16x64xf32>,
    } else {
    }
    return
  }
  func.func @transform_0(%arg0: i32, %arg1: i32) -> (i32, i32) {
    %c0_i32 = arith.constant 0 : i32
    return %arg0, %arg1 : i32, i32
  }
  func.func @transform_1(%arg0: i32, %arg1: i32) -> (i32, i32) {
    %c0_i32 = arith.constant 0 : i32
    %c0_i32_0 = arith.constant 0 : i32
    return %arg1, %c0_i32 : i32, i32
  }
  func.func @transform_2(%arg0: i32, %arg1: i32) -> (i32, i32) {
    %c0_i32 = arith.constant 0 : i32
    %c0_i32_0 = arith.constant 0 : i32
    %c0_i32_1 = arith.constant 0 : i32
    return %c0_i32, %c0_i32_0 : i32, i32
  }
  func.func @transform_3(%arg0: i32, %arg1: i32) -> (i32, i32) {
    %c0_i32 = arith.constant 0 : i32
    %c0_i32_0 = arith.constant 0 : i32
    return %arg0, %c0_i32 : i32, i32
  }
  func.func @transform_4(%arg0: i32, %arg1: i32) -> (i32, i32) {
    %c0_i32 = arith.constant 0 : i32
    %c0_i32_0 = arith.constant 0 : i32
    return %arg0, %c0_i32 : i32, i32
  }
}

</mosaic_0001>

<llo_original>
// kernel: residual_attention_block.6
$region0: #{residual_attention_block.6}
  #allocation0 [shape = 'u32[]', space=smem, size = 0x4, offset = 0x4, fixed_abs, tag = 'smem constant byte address 0x4 - core index']
  #allocation1 [shape = 'u32[144,128]{1,0:T(1,128)}', space=vmem, size = 0x12000, scoped, tag = 'internal scratch']
  %s0 = inlined_call_operand.vmem [shape: f32[16,64], index: 0, kind: input, shape index: {}]
  %s1 = inlined_call_operand.vmem [shape: bf16[16,64], index: 1, kind: input, shape index: {}]
  %s2 = inlined_call_operand.vmem [shape: bf16[64,64], index: 2, kind: input, shape index: {}]
  %s3 = inlined_call_operand.vmem [shape: f32[1,64], index: 3, kind: input, shape index: {}]
  %s4 = inlined_call_operand.vmem [shape: f32[1,64], index: 4, kind: input, shape index: {}]
  %s5 = inlined_call_operand.vmem [shape: f32[1,64], index: 5, kind: input, shape index: {}]
  %s6 = inlined_call_operand.vmem [shape: bf16[64,256], index: 6, kind: input, shape index: {}]
  %s7 = inlined_call_operand.vmem [shape: f32[1,256], index: 7, kind: input, shape index: {}]
  %s8 = inlined_call_operand.vmem [shape: f32[16,64], index: 8, kind: output, shape index: {0}]
  %s9 = inlined_call_operand.vmem [shape: bf16[16,256], index: 9, kind: output, shape index: {1}]
  %10 = xla_tuple %s8, %s9
  %s11 = sld [smem:[#allocation0]]
  $region50: #{residual_attention_block.6} parent=0
    _
  %s13 = ssub.s32 1, %s11
  %s14 = scalar_select 0, %s13, %s11
  // Predicated region
  $region2: #{residual_attention_block.6} parent=0 // pred_check
    _
  $region3: #{residual_attention_block.6} parent=0 // pred_check_branch
    %16 = sbr.rel (0) target = $region5
  $region4: #{residual_attention_block.6} parent=0 // pred_region
    _
  $region5: #{residual_attention_block.6} parent=0 // pred_fallthru
    _
  // Predicated region
  $region6: #{residual_attention_block.6} parent=0 // pred_check
    _
  $region7: #{residual_attention_block.6} parent=0 // pred_check_branch
    %18 = sbr.rel (0) target = $region9
  $region8: #{residual_attention_block.6} parent=0 // pred_region
    _
  $region9: #{residual_attention_block.6} parent=0 // pred_fallthru
    _
  // Predicated region
  $region10: #{residual_attention_block.6} parent=0 // pred_check
    _
  $region11: #{residual_attention_block.6} parent=0 // pred_check_branch
    %20 = sbr.rel (0) target = $region13
  $region12: #{residual_attention_block.6} parent=0 // pred_region
    _
  $region13: #{residual_attention_block.6} parent=0 // pred_fallthru
    _
  // Predicated region
  $region14: #{residual_attention_block.6} parent=0 // pred_check
    _
  $region15: #{residual_attention_block.6} parent=0 // pred_check_branch
    %22 = sbr.rel (0) target = $region17
  $region16: #{residual_attention_block.6} parent=0 // pred_region
    _
  $region17: #{residual_attention_block.6} parent=0 // pred_fallthru
    _
  // Predicated region
  $region18: #{residual_attention_block.6} parent=0 // pred_check
    _
  $region19: #{residual_attention_block.6} parent=0 // pred_check_branch
    %24 = sbr.rel (0) target = $region21
  $region20: #{residual_attention_block.6} parent=0 // pred_region
    _
  $region21: #{residual_attention_block.6} parent=0 // pred_fallthru
    _
  // Predicated region
  $region22: #{residual_attention_block.6} parent=0 // pred_check
    _
  $region23: #{residual_attention_block.6} parent=0 // pred_check_branch
    %26 = sbr.rel (0) target = $region25
  $region24: #{residual_attention_block.6} parent=0 // pred_region
    _
  $region25: #{residual_attention_block.6} parent=0 // pred_fallthru
    _
  // Predicated region
  $region26: #{residual_attention_block.6} parent=0 // pred_check
    _
  $region27: #{residual_attention_block.6} parent=0 // pred_check_branch
    %28 = sbr.rel (0) target = $region29
  $region28: #{residual_attention_block.6} parent=0 // pred_region
    _
  $region29: #{residual_attention_block.6} parent=0 // pred_fallthru
    _
  // Predicated region
  $region30: #{residual_attention_block.6} parent=0 // pred_check
    _
  $region31: #{residual_attention_block.6} parent=0 // pred_check_branch
    %30 = sbr.rel (0) target = $region33
  $region32: #{residual_attention_block.6} parent=0 // pred_region
    _
  $region33: #{residual_attention_block.6} parent=0 // pred_fallthru
    _
  %v32 = vld [vmem:[%s0] sm:$0xff]
  %v33 = vld [vmem:[%s0 + $0x8] sm:$0xff]
  %v34 = vld [vmem:[%s1] sm:$0xf]
  %v35 = vld [vmem:[%s1 + $0x4] sm:$0xf]
  %v36 = vld [vmem:[%s2] sm:$0xf]
  %v37 = vld [vmem:[%s2 + $0x4] sm:$0xf]
  %v38 = vld [vmem:[%s2 + $0x8] sm:$0xf]
  %v39 = vld [vmem:[%s2 + $0xc] sm:$0xf]
  %v40 = vld [vmem:[%s2 + $0x10] sm:$0xf]
  %v41 = vld [vmem:[%s2 + $0x14] sm:$0xf]
  %v42 = vld [vmem:[%s2 + $0x18] sm:$0xf]
  %v43 = vld [vmem:[%s2 + $0x1c] sm:$0xf]
  %v44 = vld [vmem:[%s3] sm:$0x1]
  %v46 = vlaneseq
  %v47 = vshrl.u32 %v46, 7
  %v48 = vsub.s32 0, %v47
  %v49 = vrot.slane %v44, %v48
  %v53 = vunpack.c.l.b16 %v34
  %v54 = vunpack.c.l.b16 %v35
  %v55 = vpack.c.b16 %v54, %v53
  %v64 = vunpack.c.l.b16 %v36
  %v65 = vunpack.c.l.b16 %v37
  %v66 = vunpack.c.l.b16 %v38
  %v67 = vunpack.c.l.b16 %v39
  %v68 = vunpack.c.l.b16 %v40
  %v69 = vunpack.c.l.b16 %v41
  %v70 = vunpack.c.l.b16 %v42
  %v71 = vunpack.c.l.b16 %v43
  %v72 = vpack.c.b16 %v65, %v64
  %v73 = vpack.c.b16 %v67, %v66
  %v74 = vpack.c.b16 %v69, %v68
  %v75 = vpack.c.b16 %v71, %v70
  %vm80 = vcmask 523264
  %v82 = vsel %vm80, %v55, 0
  %84 = vmatprep.subr.bf16.mxu0 0
  %85 = vmatpush1.bf16.msra.mxu0 0
  %86 = vmatprep.subr.bf16.mxu0 0
  %87 = vmatpush1.bf16.msra.mxu0 0
  %88 = vmatprep.subr.bf16.mxu0 0
  %89 = vmatpush1.bf16.msra.mxu0 0
  %90 = vmatprep.subr.bf16.mxu0 0
  %91 = vmatpush1.bf16.msra.mxu0 0
  %92 = vmatprep.subr.bf16.mxu0 0
  %93 = vmatpush1.bf16.msra.mxu0 %v75
  %94 = vmatprep.subr.bf16.mxu0 0
  %95 = vmatpush1.bf16.msra.mxu0 %v74
  %96 = vmatprep.subr.bf16.mxu0 0
  %97 = vmatpush1.bf16.msra.mxu0 %v73
  %98 = vmatprep.subr.bf16.mxu0 0
  %99 = vmatpush1.bf16.msra.mxu0 %v72
  %100 = vmatprep.subr.bf16.mxu0 0
  %101 = vmatpush2.bf16.msra.mxu0 0
  %102 = vmatprep.subr.bf16.mxu0 0
  %103 = vmatpush2.bf16.msra.mxu0 0
  %104 = vmatprep.subr.bf16.mxu0 0
  %105 = vmatpush2.bf16.msra.mxu0 0
  %106 = vmatprep.subr.bf16.mxu0 0
  %107 = vmatpush2.bf16.msra.mxu0 0
  %108 = vmatprep.subr.bf16.mxu0 0
  %109 = vmatpush2.bf16.msra.mxu0 0
  %110 = vmatprep.subr.bf16.mxu0 0
  %111 = vmatpush2.bf16.msra.mxu0 0
  %112 = vmatprep.subr.bf16.mxu0 0
  %113 = vmatpush2.bf16.msra.mxu0 0
  %114 = vmatprep.subr.bf16.mxu0 0
  %115 = vmatpush2.bf16.msra.mxu0 0
  %116 = vmatprep.mubr.bf16.mxu0 0
  %117 = vmatmul.mubr.bf16.gmra.mxu0 %v82
  %v118 = vpop.f32.mrf.mxu0
  %v119 = vadd.f32 %v49, %v118
  %v120 = vpop.f32.mrf.mxu0
  %v121 = vpop.f32.mrf.mxu0
  %v122 = vadd.f32 %v49, %v121
  %v123 = vpop.f32.mrf.mxu0
  %124 = vdwg.mxu0
  %v125 = vadd.f32 %v32, %v119
  %v126 = vadd.f32 %v33, %v122
  %127 = vst.msk [vmem:[%s8] sm:$0xff] %vm80, %v125
  %128 = vst.msk [vmem:[%s8 + $0x8] sm:$0xff] %vm80, %v126
  %v129 = vld [vmem:[%s4] sm:$0x1]
  %v130 = vld [vmem:[%s5] sm:$0x1]
  %v131 = vsel %vm80, %v125, 0.0
  %132 = vadd.xlane.f32.xlu0 %v131
  %v133 = vpop.xlane.xlu0 %132
  %v134 = vsel %vm80, %v126, 0.0
  %135 = vadd.xlane.f32.xlu0 %v134
  %v136 = vpop.xlane.xlu0 %135
  %v137 = vrcp.pop 64.0
  %v138 = vmul.f32 %v133, %v137
  %v139 = vmul.f32 %v136, %v137
  %v140 = vsub.f32 %v125, %v138
  %v141 = vsub.f32 %v126, %v139
  %v142 = vmul.f32 %v140, %v140
  %v143 = vmul.f32 %v141, %v141
  %v144 = vsel %vm80, %v142, 0.0
  %145 = vadd.xlane.f32.xlu0 %v144
  %v146 = vpop.xlane.xlu0 %145
  %v147 = vsel %vm80, %v143, 0.0
  %148 = vadd.xlane.f32.xlu0 %v147
  %v149 = vpop.xlane.xlu0 %148
  %v150 = vmul.f32 %v146, %v137
  %v151 = vmul.f32 %v149, %v137
  %v152 = vadd.f32 %v150, 1e-05
  %v153 = vadd.f32 %v151, 1e-05
  %v154 = vrsqrt.pop %v152
  %v155 = vrsqrt.pop %v153
  %v156 = vmul.f32 %v140, %v154
  %v157 = vmul.f32 %v141, %v155
  %v159 = vlaneseq
  %v160 = vshrl.u32 %v159, 7
  %v161 = vsub.s32 0, %v160
  %v162 = vrot.slane %v129, %v161
  %v164 = vmul.f32 %v156, %v162
  %v165 = vmul.f32 %v157, %v162
  %v167 = vlaneseq
  %v168 = vshrl.u32 %v167, 7
  %v169 = vsub.s32 0, %v168
  %v170 = vrot.slane %v130, %v169
  %v172 = vadd.f32 %v164, %v170
  %v173 = vadd.f32 %v165, %v170
  %v174 = vpack.c.bf16 %v173, %v172
  %v175 = vld [vmem:[%s6] sm:$0xff]
  %v176 = vld [vmem:[%s6 + $0x8] sm:$0xff]
  %v177 = vld [vmem:[%s6 + $0x10] sm:$0xff]
  %v178 = vld [vmem:[%s6 + $0x18] sm:$0xff]
  %v179 = vld [vmem:[%s6 + $0x20] sm:$0xff]
  %v180 = vld [vmem:[%s6 + $0x28] sm:$0xff]
  %v181 = vld [vmem:[%s6 + $0x30] sm:$0xff]
  %v182 = vld [vmem:[%s6 + $0x38] sm:$0xff]
  %v183 = vld [vmem:[%s7] sm:$0x3]
  %v185 = vlaneseq
  %v186 = vshrl.u32 %v185, 7
  %v187 = vsub.s32 0, %v186
  %v188 = vrot.slane %v183, %v187
  %v189 = vlaneseq
  %v190 = vshrl.u32 %v189, 7
  %v191 = vsub.s32 1, %v190
  %v192 = vrot.slane %v183, %v191
  %v203 = vunpack.c.l.b16 %v175
  %v204 = vunpack.c.h.b16 %v175
  %v205 = vunpack.c.l.b16 %v176
  %v206 = vunpack.c.h.b16 %v176
  %v207 = vunpack.c.l.b16 %v177
  %v208 = vunpack.c.h.b16 %v177
  %v209 = vunpack.c.l.b16 %v178
  %v210 = vunpack.c.h.b16 %v178
  %v211 = vunpack.c.l.b16 %v179
  %v212 = vunpack.c.h.b16 %v179
  %v213 = vunpack.c.l.b16 %v180
  %v214 = vunpack.c.h.b16 %v180
  %v215 = vunpack.c.l.b16 %v181
  %v216 = vunpack.c.h.b16 %v181
  %v217 = vunpack.c.l.b16 %v182
  %v218 = vunpack.c.h.b16 %v182
  %v219 = vpack.c.b16 %v205, %v203
  %v220 = vpack.c.b16 %v206, %v204
  %v221 = vpack.c.b16 %v209, %v207
  %v222 = vpack.c.b16 %v210, %v208
  %v223 = vpack.c.b16 %v213, %v211
  %v224 = vpack.c.b16 %v214, %v212
  %v225 = vpack.c.b16 %v217, %v215
  %v226 = vpack.c.b16 %v218, %v216
  %v236 = vsel %vm80, %v174, 0
  %238 = vmatprep.subr.bf16.mxu0 0
  %239 = vmatpush1.bf16.msra.mxu0 0
  %240 = vmatprep.subr.bf16.mxu0 0
  %241 = vmatpush1.bf16.msra.mxu0 0
  %242 = vmatprep.subr.bf16.mxu0 0
  %243 = vmatpush1.bf16.msra.mxu0 0
  %244 = vmatprep.subr.bf16.mxu0 0
  %245 = vmatpush1.bf16.msra.mxu0 0
  %246 = vmatprep.subr.bf16.mxu0 %v226
  %247 = vmatpush1.bf16.msra.mxu0 %v225
  %248 = vmatprep.subr.bf16.mxu0 %v224
  %249 = vmatpush1.bf16.msra.mxu0 %v223
  %250 = vmatprep.subr.bf16.mxu0 %v222
  %251 = vmatpush1.bf16.msra.mxu0 %v221
  %252 = vmatprep.subr.bf16.mxu0 %v220
  %253 = vmatpush1.bf16.msra.mxu0 %v219
  %254 = vmatprep.subr.bf16.mxu0 0
  %255 = vmatpush2.bf16.msra.mxu0 0
  %256 = vmatprep.subr.bf16.mxu0 0
  %257 = vmatpush2.bf16.msra.mxu0 0
  %258 = vmatprep.subr.bf16.mxu0 0
  %259 = vmatpush2.bf16.msra.mxu0 0
  %260 = vmatprep.subr.bf16.mxu0 0
  %261 = vmatpush2.bf16.msra.mxu0 0
  %262 = vmatprep.subr.bf16.mxu0 0
  %263 = vmatpush2.bf16.msra.mxu0 0
  %264 = vmatprep.subr.bf16.mxu0 0
  %265 = vmatpush2.bf16.msra.mxu0 0
  %266 = vmatprep.subr.bf16.mxu0 0
  %267 = vmatpush2.bf16.msra.mxu0 0
  %268 = vmatprep.subr.bf16.mxu0 0
  %269 = vmatpush2.bf16.msra.mxu0 0
  %270 = vmatprep.mubr.bf16.mxu0 0
  %271 = vmatmul.mubr.bf16.gmra.mxu0 %v236
  %v272 = vpop.f32.mrf.mxu0
  %v273 = vadd.f32 %v188, %v272
  %v274 = vpop.f32.mrf.mxu0
  %v275 = vadd.f32 %v192, %v274
  %v276 = vpop.f32.mrf.mxu0
  %v277 = vadd.f32 %v188, %v276
  %v278 = vpop.f32.mrf.mxu0
  %v279 = vadd.f32 %v192, %v278
  %280 = vdwg.mxu0
  %v281 = vmul.f32 %v273, -1.702
  %v282 = vmul.f32 %v275, -1.702
  %v283 = vmul.f32 %v277, -1.702
  %v284 = vmul.f32 %v279, -1.702
  %v285 = vmul.f32 %v281, 1.442695
  %v286 = vpow.pop %v285
  %v287 = vmul.f32 %v282, 1.442695
  %v288 = vpow.pop %v287
  %v289 = vmul.f32 %v283, 1.442695
  %v290 = vpow.pop %v289
  %v291 = vmul.f32 %v284, 1.442695
  %v292 = vpow.pop %v291
  %v293 = vadd.f32 %v286, 1.0
  %v294 = vadd.f32 %v288, 1.0
  %v295 = vadd.f32 %v290, 1.0
  %v296 = vadd.f32 %v292, 1.0
  %v297 = vrcp.pop %v293
  %v298 = vmul.f32 1.0, %v297
  %v299 = vrcp.pop %v294
  %v300 = vmul.f32 1.0, %v299
  %v301 = vrcp.pop %v295
  %v302 = vmul.f32 1.0, %v301
  %v303 = vrcp.pop %v296
  %v304 = vmul.f32 1.0, %v303
  %v305 = vmul.f32 %v273, %v298
  %v306 = vmul.f32 %v275, %v300
  %v307 = vmul.f32 %v277, %v302
  %v308 = vmul.f32 %v279, %v304
  %v309 = vpack.c.bf16 %v307, %v305
  %v310 = vpack.c.bf16 %v308, %v306
  %v313 = vunpack.c.l.b16 %v309
  %v314 = vunpack.c.l.b16 %v310
  %v315 = vunpack.c.h.b16 %v309
  %v316 = vunpack.c.h.b16 %v310
  %v317 = vpack.c.b16 %v314, %v313
  %v318 = vpack.c.b16 %v316, %v315
  %321 = vst [vmem:[%s9] sm:$0xff] %v317
  %322 = vst [vmem:[%s9 + $0x8] sm:$0xff] %v318
  // Predicated region
  $region34: #{residual_attention_block.6} parent=0 // pred_check
    _
  $region35: #{residual_attention_block.6} parent=0 // pred_check_branch
    %324 = sbr.rel (0) target = $region37
  $region36: #{residual_attention_block.6} parent=0 // pred_region
    _
  $region37: #{residual_attention_block.6} parent=0 // pred_fallthru
    _
  // Predicated region
  $region38: #{residual_attention_block.6} parent=0 // pred_check
    _
  $region39: #{residual_attention_block.6} parent=0 // pred_check_branch
    %326 = sbr.rel (0) target = $region41
  $region40: #{residual_attention_block.6} parent=0 // pred_region
    _
  $region41: #{residual_attention_block.6} parent=0 // pred_fallthru
    _
  // Predicated region
  $region42: #{residual_attention_block.6} parent=0 // pred_check
    _
  $region43: #{residual_attention_block.6} parent=0 // pred_check_branch
    %328 = sbr.rel (0) target = $region45
  $region44: #{residual_attention_block.6} parent=0 // pred_region
    _
  $region45: #{residual_attention_block.6} parent=0 // pred_fallthru
    _
  // Predicated region
  $region46: #{residual_attention_block.6} parent=0 // pred_check
    _
  $region47: #{residual_attention_block.6} parent=0 // pred_check_branch
    %330 = sbr.rel (0) target = $region49
  $region48: #{residual_attention_block.6} parent=0 // pred_region
    _
  $region49: #{residual_attention_block.6} parent=0 // pred_fallthru
    _

// kernel: residual_attention_block.4
$region0: #{residual_attention_block.4}
  #allocation0 [shape = 'u32[]', space=smem, size = 0x4, offset = 0x4, fixed_abs, tag = 'smem constant byte address 0x4 - core index']
  #allocation1 [shape = 'u32[144,128]{1,0:T(1,128)}', space=vmem, size = 0x12000, scoped, tag = 'internal scratch']
  %s0 = inlined_call_operand.vmem [shape: f32[16,64], index: 0, kind: input, shape index: {}]
  %s1 = inlined_call_operand.vmem [shape: f32[1,64], index: 1, kind: input, shape index: {}]
  %s2 = inlined_call_operand.vmem [shape: f32[1,64], index: 2, kind: input, shape index: {}]
  %s3 = inlined_call_operand.hbm [shape: bf16[64,192], index: 3, kind: input, shape index: {}]
  %s4 = inlined_call_operand.vmem [shape: f32[1,192], index: 4, kind: input, shape index: {}]
  %s5 = inlined_call_operand.vmem [shape: bf16[16,64], index: 5, kind: output, shape index: {0}]
  %s6 = inlined_call_operand.vmem [shape: bf16[16,64], index: 6, kind: output, shape index: {1}]
  %s7 = inlined_call_operand.vmem [shape: bf16[16,64], index: 7, kind: output, shape index: {2}]
  %8 = xla_tuple %s5, %s6, %s7
  %s9 = sld [smem:[#allocation0]]
  $region50: #{residual_attention_block.4} parent=0
    _
  %s11 = ssub.s32 1, %s9
  %s12 = scalar_select 0, %s11, %s9
  $region1: #{residual_attention_block.4} parent=0
    #allocation2 [shape = 'u8[32768]{0}', space=vmem, size = 0x8000, scoped, tag = 'input window, operand 3, single buffered']
    #allocation3 [shape = 's32[1]{0}', space=sflag, size = 0x4, scoped, tag = 'scoped memory for residual_attention_block.4']
    %13 = vsyncpa [#allocation3], 0
    // Predicated region
    $region2: #{residual_attention_block.4} parent=1 // pred_check
      _
    $region3: #{residual_attention_block.4} parent=1 // pred_check_branch
      %15 = sbr.rel (0) target = $region5
    $region4: #{residual_attention_block.4} parent=1 // pred_region
      _
    $region5: #{residual_attention_block.4} parent=1 // pred_fallthru
      _
    // Predicated region
    $region6: #{residual_attention_block.4} parent=1 // pred_check
      _
    $region7: #{residual_attention_block.4} parent=1 // pred_check_branch
      %17 = sbr.rel (0) target = $region9
    $region8: #{residual_attention_block.4} parent=1 // pred_region
      _
    $region9: #{residual_attention_block.4} parent=1 // pred_fallthru
      _
    // Predicated region
    $region10: #{residual_attention_block.4} parent=1 // pred_check
      _
    $region11: #{residual_attention_block.4} parent=1 // pred_check_branch
      %19 = sbr.rel (0) target = $region13
    $region12: #{residual_attention_block.4} parent=1 // pred_region
      _
    $region13: #{residual_attention_block.4} parent=1 // pred_fallthru
      _
    // Predicated region
    $region14: #{residual_attention_block.4} parent=1 // pred_check
      _
    $region15: #{residual_attention_block.4} parent=1 // pred_check_branch
      %21 = sbr.rel (0) target = $region17
    $region16: #{residual_attention_block.4} parent=1 // pred_region
      %s23 = ssub.s32 1024, 1024
      %24 = vsyncadd [#allocation3], %s23
      %s25 = sshll.u32 [#allocation2], 4
      %s26 = int_to_ptr.vmem [resolvable:$true] %s25
      %31 = dma.hbm_to_vmem [thread:$0]  %s3, 1024, %s26, [#allocation3], 128, 128, 8
    $region17: #{residual_attention_block.4} parent=1 // pred_fallthru
      _
    // Predicated region
    $region18: #{residual_attention_block.4} parent=1 // pred_check
      _
    $region19: #{residual_attention_block.4} parent=1 // pred_check_branch
      %33 = sbr.rel (0) target = $region21
    $region20: #{residual_attention_block.4} parent=1 // pred_region
      _
    $region21: #{residual_attention_block.4} parent=1 // pred_fallthru
      _
    // Predicated region
    $region22: #{residual_attention_block.4} parent=1 // pred_check
      _
    $region23: #{residual_attention_block.4} parent=1 // pred_check_branch
      %35 = sbr.rel (0) target = $region25
    $region24: #{residual_attention_block.4} parent=1 // pred_region
      %36 = dma.done [#allocation3], 1024
    $region25: #{residual_attention_block.4} parent=1 // pred_fallthru
      _
    %v38 = vld [vmem:[%s0] sm:$0xff]
    %v39 = vld [vmem:[%s0 + $0x8] sm:$0xff]
    %v40 = vld [vmem:[%s1] sm:$0x1]
    %v41 = vld [vmem:[%s2] sm:$0x1]
    %vm42 = vcmask 523264
    %v43 = vsel %vm42, %v38, 0.0
    %44 = vadd.xlane.f32.xlu0 %v43
    %v45 = vpop.xlane.xlu0 %44
    %v46 = vsel %vm42, %v39, 0.0
    %47 = vadd.xlane.f32.xlu0 %v46
    %v48 = vpop.xlane.xlu0 %47
    %v49 = vrcp.pop 64.0
    %v50 = vmul.f32 %v45, %v49
    %v51 = vmul.f32 %v48, %v49
    %v52 = vsub.f32 %v38, %v50
    %v53 = vsub.f32 %v39, %v51
    %v54 = vmul.f32 %v52, %v52
    %v55 = vmul.f32 %v53, %v53
    %v56 = vsel %vm42, %v54, 0.0
    %57 = vadd.xlane.f32.xlu0 %v56
    %v58 = vpop.xlane.xlu0 %57
    %v59 = vsel %vm42, %v55, 0.0
    %60 = vadd.xlane.f32.xlu0 %v59
    %v61 = vpop.xlane.xlu0 %60
    %v62 = vmul.f32 %v58, %v49
    %v63 = vmul.f32 %v61, %v49
    %v64 = vadd.f32 %v62, 1e-05
    %v65 = vadd.f32 %v63, 1e-05
    %v66 = vrsqrt.pop %v64
    %v67 = vrsqrt.pop %v65
    %v68 = vmul.f32 %v52, %v66
    %v69 = vmul.f32 %v53, %v67
    %v71 = vlaneseq
    %v72 = vshrl.u32 %v71, 7
    %v73 = vsub.s32 0, %v72
    %v74 = vrot.slane %v40, %v73
    %v76 = vmul.f32 %v68, %v74
    %v77 = vmul.f32 %v69, %v74
    %v79 = vlaneseq
    %v80 = vshrl.u32 %v79, 7
    %v81 = vsub.s32 0, %v80
    %v82 = vrot.slane %v41, %v81
    %v84 = vadd.f32 %v76, %v82
    %v85 = vadd.f32 %v77, %v82
    %v86 = vpack.c.bf16 %v85, %v84
    %v87 = vld [vmem:[#allocation2] sm:$0xff]
    %v88 = vld [vmem:[#allocation2 + $0x8] sm:$0xff]
    %v89 = vld [vmem:[#allocation2 + $0x10] sm:$0xff]
    %v90 = vld [vmem:[#allocation2 + $0x18] sm:$0xff]
    %v91 = vld [vmem:[#allocation2 + $0x20] sm:$0xff]
    %v92 = vld [vmem:[#allocation2 + $0x28] sm:$0xff]
    %v93 = vld [vmem:[#allocation2 + $0x30] sm:$0xff]
    %v94 = vld [vmem:[#allocation2 + $0x38] sm:$0xff]
    %v95 = vld [vmem:[%s4] sm:$0x3]
    %v97 = vlaneseq
    %v98 = vshrl.u32 %v97, 7
    %v99 = vsub.s32 0, %v98
    %v100 = vrot.slane %v95, %v99
    %v101 = vlaneseq
    %v102 = vshrl.u32 %v101, 7
    %v103 = vsub.s32 1, %v102
    %v104 = vrot.slane %v95, %v103
    %v115 = vunpack.c.l.b16 %v87
    %v116 = vunpack.c.h.b16 %v87
    %v117 = vunpack.c.l.b16 %v88
    %v118 = vunpack.c.h.b16 %v88
    %v119 = vunpack.c.l.b16 %v89
    %v120 = vunpack.c.h.b16 %v89
    %v121 = vunpack.c.l.b16 %v90
    %v122 = vunpack.c.h.b16 %v90
    %v123 = vunpack.c.l.b16 %v91
    %v124 = vunpack.c.h.b16 %v91
    %v125 = vunpack.c.l.b16 %v92
    %v126 = vunpack.c.h.b16 %v92
    %v127 = vunpack.c.l.b16 %v93
    %v128 = vunpack.c.h.b16 %v93
    %v129 = vunpack.c.l.b16 %v94
    %v130 = vunpack.c.h.b16 %v94
    %v131 = vpack.c.b16 %v117, %v115
    %v132 = vpack.c.b16 %v118, %v116
    %v133 = vpack.c.b16 %v121, %v119
    %v134 = vpack.c.b16 %v122, %v120
    %v135 = vpack.c.b16 %v125, %v123
    %v136 = vpack.c.b16 %v126, %v124
    %v137 = vpack.c.b16 %v129, %v127
    %v138 = vpack.c.b16 %v130, %v128
    %v148 = vsel %vm42, %v86, 0
    %150 = vmatprep.subr.bf16.mxu0 0
    %151 = vmatpush1.bf16.msra.mxu0 0
    %152 = vmatprep.subr.bf16.mxu0 0
    %153 = vmatpush1.bf16.msra.mxu0 0
    %154 = vmatprep.subr.bf16.mxu0 0
    %155 = vmatpush1.bf16.msra.mxu0 0
    %156 = vmatprep.subr.bf16.mxu0 0
    %157 = vmatpush1.bf16.msra.mxu0 0
    %158 = vmatprep.subr.bf16.mxu0 %v138
    %159 = vmatpush1.bf16.msra.mxu0 %v137
    %160 = vmatprep.subr.bf16.mxu0 %v136
    %161 = vmatpush1.bf16.msra.mxu0 %v135
    %162 = vmatprep.subr.bf16.mxu0 %v134
    %163 = vmatpush1.bf16.msra.mxu0 %v133
    %164 = vmatprep.subr.bf16.mxu0 %v132
    %165 = vmatpush1.bf16.msra.mxu0 %v131
    %166 = vmatprep.subr.bf16.mxu0 0
    %167 = vmatpush2.bf16.msra.mxu0 0
    %168 = vmatprep.subr.bf16.mxu0 0
    %169 = vmatpush2.bf16.msra.mxu0 0
    %170 = vmatprep.subr.bf16.mxu0 0
    %171 = vmatpush2.bf16.msra.mxu0 0
    %172 = vmatprep.subr.bf16.mxu0 0
    %173 = vmatpush2.bf16.msra.mxu0 0
    %174 = vmatprep.subr.bf16.mxu0 0
    %175 = vmatpush2.bf16.msra.mxu0 0
    %176 = vmatprep.subr.bf16.mxu0 0
    %177 = vmatpush2.bf16.msra.mxu0 0
    %178 = vmatprep.subr.bf16.mxu0 0
    %179 = vmatpush2.bf16.msra.mxu0 0
    %180 = vmatprep.subr.bf16.mxu0 0
    %181 = vmatpush2.bf16.msra.mxu0 0
    %182 = vmatprep.mubr.bf16.mxu0 0
    %183 = vmatmul.mubr.bf16.gmra.mxu0 %v148
    %v184 = vpop.f32.mrf.mxu0
    %v185 = vadd.f32 %v100, %v184
    %v186 = vpop.f32.mrf.mxu0
    %v187 = vadd.f32 %v104, %v186
    %v188 = vpop.f32.mrf.mxu0
    %v189 = vadd.f32 %v100, %v188
    %v190 = vpop.f32.mrf.mxu0
    %v191 = vadd.f32 %v104, %v190
    %192 = vdwg.mxu0
    %v193 = vmul.f32 %v185, 0.25
    %v194 = vmul.f32 %v189, 0.25
    %v195 = vpack.c.bf16 %v194, %v193
    %v197 = vunpack.c.l.b16 %v195
    %v198 = vunpack.c.h.b16 %v195
    %v199 = vpack.c.b16 %v197, %v197
    %v200 = vpack.c.b16 %v198, %v198
    %vm203 = vcmask 519168
    %204 = vst.msk [vmem:[%s5] sm:$0xf] %vm203, %v199
    %205 = vst.msk [vmem:[%s5 + $0x4] sm:$0xf] %vm203, %v200
    %v206 = vpack.c.bf16 %v189, %v185
    %v208 = vunpack.c.l.b16 %v206
    %v209 = vunpack.c.h.b16 %v206
    %v210 = vpack.c.b16 %v208, %v208
    %v211 = vpack.c.b16 %v209, %v209
    %212 = vrot.lane.b32.xlu0 %v210, 64
    %v213 = vpop.permute.xlu0 %212
    %214 = vrot.lane.b32.xlu0 %v211, 64
    %v215 = vpop.permute.xlu0 %214
    %218 = vst.msk [vmem:[%s6] sm:$0xf] %vm203, %v213
    %219 = vst.msk [vmem:[%s6 + $0x4] sm:$0xf] %vm203, %v215
    %v220 = vpack.c.bf16 %v191, %v187
    %v222 = vunpack.c.l.b16 %v220
    %v223 = vunpack.c.h.b16 %v220
    %v224 = vpack.c.b16 %v222, %v222
    %v225 = vpack.c.b16 %v223, %v223
    %228 = vst.msk [vmem:[%s7] sm:$0xf] %vm203, %v224
    %229 = vst.msk [vmem:[%s7 + $0x4] sm:$0xf] %vm203, %v225
    // Predicated region
    $region26: #{residual_attention_block.4} parent=1 // pred_check
      _
    $region27: #{residual_attention_block.4} parent=1 // pred_check_branch
      %231 = sbr.rel (0) target = $region29
    $region28: #{residual_attention_block.4} parent=1 // pred_region
      _
    $region29: #{residual_attention_block.4} parent=1 // pred_fallthru
      _
    // Predicated region
    $region30: #{residual_attention_block.4} parent=1 // pred_check
      _
    $region31: #{residual_attention_block.4} parent=1 // pred_check_branch
      %233 = sbr.rel (0) target = $region33
    $region32: #{residual_attention_block.4} parent=1 // pred_region
      _
    $region33: #{residual_attention_block.4} parent=1 // pred_fallthru
      _
    // Predicated region
    $region34: #{residual_attention_block.4} parent=1 // pred_check
      _
    $region35: #{residual_attention_block.4} parent=1 // pred_check_branch
      %235 = sbr.rel (0) target = $region37
    $region36: #{residual_attention_block.4} parent=1 // pred_region
      _
    $region37: #{residual_attention_block.4} parent=1 // pred_fallthru
      _
    // Predicated region
    $region38: #{residual_attention_block.4} parent=1 // pred_check
      _
    $region39: #{residual_attention_block.4} parent=1 // pred_check_branch
      %237 = sbr.rel (0) target = $region41
    $region40: #{residual_attention_block.4} parent=1 // pred_region
      _
    $region41: #{residual_attention_block.4} parent=1 // pred_fallthru
      _
    // Predicated region
    $region42: #{residual_attention_block.4} parent=1 // pred_check
      _
    $region43: #{residual_attention_block.4} parent=1 // pred_check_branch
      %239 = sbr.rel (0) target = $region45
    $region44: #{residual_attention_block.4} parent=1 // pred_region
      _
    $region45: #{residual_attention_block.4} parent=1 // pred_fallthru
      _
    // Predicated region
    $region46: #{residual_attention_block.4} parent=1 // pred_check
      _
    $region47: #{residual_attention_block.4} parent=1 // pred_check_branch
      %241 = sbr.rel (0) target = $region49
    $region48: #{residual_attention_block.4} parent=1 // pred_region
      _
    $region49: #{residual_attention_block.4} parent=1 // pred_fallthru
      _
    %242 = vsyncpa [#allocation3], 1

// kernel: residual_attention_block.5
$region0: #{residual_attention_block.5}
  #allocation0 [shape = 'u32[]', space=smem, size = 0x4, offset = 0x4, fixed_abs, tag = 'smem constant byte address 0x4 - core index']
  #allocation1 [shape = 'u32[144,128]{1,0:T(1,128)}', space=vmem, size = 0x12000, scoped, tag = 'internal scratch']
  #allocation2 [shape = 'f32[4,8,1]{2,1,0:T(8,128)}', space=vmem, size = 0x4000, scoped, tag = 'scratch operand']
  #allocation3 [shape = 'f32[4,8,1]{2,1,0:T(8,128)}', space=vmem, size = 0x4000, scoped, tag = 'scratch operand']
  #allocation4 [shape = 'f32[4,8,16]{2,1,0:T(8,128)}', space=vmem, size = 0x4000, scoped, tag = 'scratch operand']
  %s0 = inlined_call_operand.vmem [shape: bf16[2,8,64], index: 0, kind: input, shape index: {}]
  %s1 = inlined_call_operand.vmem [shape: bf16[2,8,64], index: 1, kind: input, shape index: {}]
  %s2 = inlined_call_operand.vmem [shape: bf16[2,8,64], index: 2, kind: input, shape index: {}]
  %s3 = inlined_call_operand.vmem [shape: bf16[2,8,64], index: 3, kind: output, shape index: {}]
  %s4 = sld [smem:[#allocation0]]
  $region53: #{residual_attention_block.5} parent=0
    _
  %s6 = ssub.s32 1, %s4
  %s7 = scalar_select 0, %s6, %s4
  loop: start=0, step=1, limit=4
  $region2: #{residual_attention_block.5} parent=0 // loop_pre_header
    _
  $region3: #{residual_attention_block.5} parent=0 // loop_header
    %s9 = sphi 0, %s13
    %p10 = scmp.ge.s32.totalorder %s9, 4
    %s16 = sphi 0, %s35
    %s17 = sphi 0, %s31
    %s18 = sphi 0, %s27
    %s19 = sphi 0, %s16
    %s20 = sphi 0, %s17
    %s21 = sphi 0, %s18
    %s22 = sphi 0, %s19
    %s23 = sphi 0, %s20
    %s24 = sphi 0, %s21
    %s40 = sphi 0, %s42
    %s43 = sphi 0, %s40
    %s44 = sphi 0, %s43
    %s60 = sphi 0, %s44
    %s68 = sphi 0, %s70
    %s71 = sphi 0, %s68
    %s72 = sphi 0, %s71
    %s88 = sphi 0, %s72
    %s96 = sphi 0, %s98
    %s99 = sphi 0, %s96
    %s100 = sphi 0, %s99
    %s116 = sphi 0, %s100
    %s124 = sphi 0, %s126
    %s127 = sphi 0, %s124
    %s128 = sphi 0, %s127
    %s144 = sphi 0, %s128
  $region4: #{residual_attention_block.5} parent=0 // loop_header_branch
    %12 = sbr.rel (%p10) target = $region8
  $region5: #{residual_attention_block.5} parent=0 // loop_body
    %s14 = ssub.s32 %s9, 1
    %s15 = ssub.s32 %s9, 2
    %s25 = sadd.s32 1, %s18
    %p26 = scmp.ge.s32.totalorder %s25, 1
    %s27 = scalar_select %p26, 0, %s25
    %s28 = sadd.s32 1, %s17
    %s29 = scalar_select %p26, %s28, %s17
    %p30 = scmp.ge.s32.totalorder %s29, 1
    %s31 = scalar_select %p30, 0, %s29
    %s32 = sadd.s32 1, %s16
    %s33 = scalar_select %p30, %s32, %s16
    %p34 = scmp.ge.s32.totalorder %s33, 2
    %s35 = scalar_select %p34, 0, %s33
    %s36 = ssub.s32 %s16, %s35
    %s37 = ssub.s32 %s17, %s31
    %s38 = sor.u32 %s36, %s37
    %p39 = scmp.eq.s32.totalorder %s38, 0
    %s41 = sadd.s32 %s40, 1
    %s42 = scalar_select %p39, %s40, %s41
    %p45 = pneg %p39
    %p46 = scmp.eq.s32.totalorder %s9, 1
    %p47 = por %p45, %p46
    %p48 = scmp.ne.s32.totalorder %s40, %s43
    %p49 = scmp.eq.s32.totalorder %s9, 0
    %p50 = por %p48, %p49
    %p51 = scmp.ne.s32.totalorder %s40, %s43
    %p52 = scmp.eq.s32.totalorder %s14, 1
    %p53 = por %p51, %p52
    %p54 = scmp.ne.s32.totalorder %s43, %s44
    %p55 = scmp.eq.s32.totalorder %s14, 0
    %p56 = por %p54, %p55
    %p57 = scmp.ne.s32.totalorder %s43, %s44
    %p58 = scmp.eq.s32.totalorder %s15, 1
    %p59 = por %p57, %p58
    %p61 = scmp.ne.s32.totalorder %s44, %s60
    %p62 = scmp.eq.s32.totalorder %s15, 0
    %p63 = por %p61, %p62
    %s64 = ssub.s32 %s16, %s35
    %s65 = ssub.s32 %s18, %s27
    %s66 = sor.u32 %s64, %s65
    %p67 = scmp.eq.s32.totalorder %s66, 0
    %s69 = sadd.s32 %s68, 1
    %s70 = scalar_select %p67, %s68, %s69
    %p73 = pneg %p67
    %p74 = scmp.eq.s32.totalorder %s9, 1
    %p75 = por %p73, %p74
    %p76 = scmp.ne.s32.totalorder %s68, %s71
    %p77 = scmp.eq.s32.totalorder %s9, 0
    %p78 = por %p76, %p77
    %p79 = scmp.ne.s32.totalorder %s68, %s71
    %p80 = scmp.eq.s32.totalorder %s14, 1
    %p81 = por %p79, %p80
    %p82 = scmp.ne.s32.totalorder %s71, %s72
    %p83 = scmp.eq.s32.totalorder %s14, 0
    %p84 = por %p82, %p83
    %p85 = scmp.ne.s32.totalorder %s71, %s72
    %p86 = scmp.eq.s32.totalorder %s15, 1
    %p87 = por %p85, %p86
    %p89 = scmp.ne.s32.totalorder %s72, %s88
    %p90 = scmp.eq.s32.totalorder %s15, 0
    %p91 = por %p89, %p90
    %s92 = ssub.s32 %s16, %s35
    %s93 = ssub.s32 %s18, %s27
    %s94 = sor.u32 %s92, %s93
    %p95 = scmp.eq.s32.totalorder %s94, 0
    %s97 = sadd.s32 %s96, 1
    %s98 = scalar_select %p95, %s96, %s97
    %p101 = pneg %p95
    %p102 = scmp.eq.s32.totalorder %s9, 1
    %p103 = por %p101, %p102
    %p104 = scmp.ne.s32.totalorder %s96, %s99
    %p105 = scmp.eq.s32.totalorder %s9, 0
    %p106 = por %p104, %p105
    %p107 = scmp.ne.s32.totalorder %s96, %s99
    %p108 = scmp.eq.s32.totalorder %s14, 1
    %p109 = por %p107, %p108
    %p110 = scmp.ne.s32.totalorder %s99, %s100
    %p111 = scmp.eq.s32.totalorder %s14, 0
    %p112 = por %p110, %p111
    %p113 = scmp.ne.s32.totalorder %s99, %s100
    %p114 = scmp.eq.s32.totalorder %s15, 1
    %p115 = por %p113, %p114
    %p117 = scmp.ne.s32.totalorder %s100, %s116
    %p118 = scmp.eq.s32.totalorder %s15, 0
    %p119 = por %p117, %p118
    %s120 = ssub.s32 %s16, %s35
    %s121 = ssub.s32 %s17, %s31
    %s122 = sor.u32 %s120, %s121
    %p123 = scmp.eq.s32.totalorder %s122, 0
    %s125 = sadd.s32 %s124, 1
    %s126 = scalar_select %p123, %s124, %s125
    %p129 = pneg %p123
    %p130 = scmp.eq.s32.totalorder %s9, 1
    %p131 = por %p129, %p130
    %p132 = scmp.ne.s32.totalorder %s124, %s127
    %p133 = scmp.eq.s32.totalorder %s9, 0
    %p134 = por %p132, %p133
    %p135 = scmp.ne.s32.totalorder %s124, %s127
    %p136 = scmp.eq.s32.totalorder %s14, 1
    %p137 = por %p135, %p136
    %p138 = scmp.ne.s32.totalorder %s127, %s128
    %p139 = scmp.eq.s32.totalorder %s14, 0
    %p140 = por %p138, %p139
    %p141 = scmp.ne.s32.totalorder %s127, %s128
    %p142 = scmp.eq.s32.totalorder %s15, 1
    %p143 = por %p141, %p142
    %p145 = scmp.ne.s32.totalorder %s128, %s144
    %p146 = scmp.eq.s32.totalorder %s15, 0
    %p147 = por %p145, %p146
    %p148 = scmp.le.s32.totalorder 1, %s9
    %p149 = scmp.lt.s32.totalorder %s9, 3
    %p150 = pnand %p148, %p149
    %p151 = pneg %p150
    // Predicated region
    $region9: #{residual_attention_block.5} parent=5 // pred_check
      _
    $region10: #{residual_attention_block.5} parent=5 // pred_check_branch
      %153 = sbr.rel (%p150) target = $region12
    $region11: #{residual_attention_block.5} parent=5 // pred_region
      %s154 = ssub.s32 %s9, 1
    $region12: #{residual_attention_block.5} parent=5 // pred_fallthru
      _
    %p155 = scmp.lt.s32.totalorder %s9, 2
    // Predicated region
    $region13: #{residual_attention_block.5} parent=5 // pred_check
      %p156 = pneg %p155
    $region14: #{residual_attention_block.5} parent=5 // pred_check_branch
      %158 = sbr.rel (%p156) target = $region16
    $region15: #{residual_attention_block.5} parent=5 // pred_region
      // Predicated region
      $region17: #{residual_attention_block.5} parent=15 // pred_check
        %p159 = pneg %p50
      $region18: #{residual_attention_block.5} parent=15 // pred_check_branch
        %161 = sbr.rel (%p159) target = $region20
      $region19: #{residual_attention_block.5} parent=15 // pred_region
        %p162 = scmp.lt.s32.totalorder %s16, 1
        %s163 = scalar_select %p162, %s16, 1
        %p164 = scmp.lt.s32.totalorder %s17, 0
        %s165 = scalar_select %p164, %s17, 0
        %s166 = sadd.s32 %s165, %s163
        %s167 = smul.addr %s166, 4
        %s168 = scalar_lea.vmem %s0, %s167
      $region20: #{residual_attention_block.5} parent=15 // pred_fallthru
        _
      // Predicated region
      $region21: #{residual_attention_block.5} parent=15 // pred_check
        %p169 = pneg %p78
      $region22: #{residual_attention_block.5} parent=15 // pred_check_branch
        %171 = sbr.rel (%p169) target = $region24
      $region23: #{residual_attention_block.5} parent=15 // pred_region
        %p172 = scmp.lt.s32.totalorder %s16, 1
        %s173 = scalar_select %p172, %s16, 1
        %p174 = scmp.lt.s32.totalorder %s18, 0
        %s175 = scalar_select %p174, %s18, 0
        %s176 = sadd.s32 %s175, %s173
        %s177 = smul.addr %s176, 4
        %s178 = scalar_lea.vmem %s1, %s177
      $region24: #{residual_attention_block.5} parent=15 // pred_fallthru
        _
      // Predicated region
      $region25: #{residual_attention_block.5} parent=15 // pred_check
        %p179 = pneg %p106
      $region26: #{residual_attention_block.5} parent=15 // pred_check_branch
        %181 = sbr.rel (%p179) target = $region28
      $region27: #{residual_attention_block.5} parent=15 // pred_region
        %p182 = scmp.lt.s32.totalorder %s16, 1
        %s183 = scalar_select %p182, %s16, 1
        %p184 = scmp.lt.s32.totalorder %s18, 0
        %s185 = scalar_select %p184, %s18, 0
        %s186 = sadd.s32 %s185, %s183
        %s187 = smul.addr %s186, 4
        %s188 = scalar_lea.vmem %s2, %s187
      $region28: #{residual_attention_block.5} parent=15 // pred_fallthru
        _
    $region16: #{residual_attention_block.5} parent=5 // pred_fallthru
      _
    %p189 = scmp.le.s32.totalorder 1, %s9
    %p190 = scmp.lt.s32.totalorder %s9, 3
    %p191 = pnand %p189, %p190
    %p192 = pneg %p191
    // Predicated region
    $region29: #{residual_attention_block.5} parent=5 // pred_check
      _
    $region30: #{residual_attention_block.5} parent=5 // pred_check_branch
      %194 = sbr.rel (%p191) target = $region32
    $region31: #{residual_attention_block.5} parent=5 // pred_region
      %s195 = ssub.s32 %s9, 1
      %p196 = scmp.lt.s32.totalorder %s19, 1
      %s197 = scalar_select %p196, %s19, 1
      %p198 = scmp.lt.s32.totalorder %s20, 0
      %s199 = scalar_select %p198, %s20, 0
      %s200 = sadd.s32 %s199, %s197
      %s201 = smul.addr %s200, 4
      %s202 = scalar_lea.vmem %s0, %s201
      %p203 = pneg %p56
      %p204 = pneg %p53
      %p205 = scmp.lt.s32.totalorder %s19, 1
      %s206 = scalar_select %p205, %s19, 1
      %p207 = scmp.lt.s32.totalorder %s21, 0
      %s208 = scalar_select %p207, %s21, 0
      %s209 = sadd.s32 %s208, %s206
      %s210 = smul.addr %s209, 4
      %s211 = scalar_lea.vmem %s1, %s210
      %p212 = pneg %p84
      %p213 = pneg %p81
      %p214 = scmp.lt.s32.totalorder %s19, 1
      %s215 = scalar_select %p214, %s19, 1
      %p216 = scmp.lt.s32.totalorder %s21, 0
      %s217 = scalar_select %p216, %s21, 0
      %s218 = sadd.s32 %s217, %s215
      %s219 = smul.addr %s218, 4
      %s220 = scalar_lea.vmem %s2, %s219
      %p221 = pneg %p112
      %p222 = pneg %p109
      %p223 = pneg %p140
      %p224 = pneg %p137
      %p225 = scmp.lt.s32.totalorder %s19, 1
      %s226 = scalar_select %p225, %s19, 1
      %p227 = scmp.lt.s32.totalorder %s20, 0
      %s228 = scalar_select %p227, %s20, 0
      %s229 = sadd.s32 %s228, %s226
      %s230 = smul.addr %s229, 4
      %s231 = scalar_lea.vmem %s3, %s230
      %p232 = scmp.lt.s32.totalorder %s19, 1
      %s233 = scalar_select %p232, %s19, 1
      %p234 = scmp.lt.s32.totalorder %s20, 0
      %s235 = scalar_select %p234, %s20, 0
      %s236 = sadd.s32 %s235, %s233
      %s237 = smul.addr %s236, 4
      %s238 = scalar_lea.vmem %s0, %s237
      %p239 = scmp.lt.s32.totalorder %s19, 1
      %s240 = scalar_select %p239, %s19, 1
      %p241 = scmp.lt.s32.totalorder %s21, 0
      %s242 = scalar_select %p241, %s21, 0
      %s243 = sadd.s32 %s242, %s240
      %s244 = smul.addr %s243, 4
      %s245 = scalar_lea.vmem %s1, %s244
      %p246 = scmp.lt.s32.totalorder %s19, 1
      %s247 = scalar_select %p246, %s19, 1
      %p248 = scmp.lt.s32.totalorder %s21, 0
      %s249 = scalar_select %p248, %s21, 0
      %s250 = sadd.s32 %s249, %s247
      %s251 = smul.addr %s250, 4
      %s252 = scalar_lea.vmem %s2, %s251
      %p253 = scmp.lt.s32.totalorder %s19, 1
      %s254 = scalar_select %p253, %s19, 1
      %p255 = scmp.lt.s32.totalorder %s20, 0
      %s256 = scalar_select %p255, %s20, 0
      %s257 = sadd.s32 %s256, %s254
      %s258 = smul.addr %s257, 4
      %s259 = scalar_lea.vmem %s3, %s258
      %p261 = scmp.eq.s32.totalorder %s21, 0
      // Predicated region
      $region33: #{residual_attention_block.5} parent=31 // pred_check
        %p262 = pneg %p261
      $region34: #{residual_attention_block.5} parent=31 // pred_check_branch
        %264 = sbr.rel (%p262) target = $region36
      $region35: #{residual_attention_block.5} parent=31 // pred_region
        %vm265 = vcmask 7168
        %266 = vst.msk [vmem:[#allocation2] sm:$0xff] %vm265, -inf
        %267 = vst.msk [vmem:[#allocation2 + $0x8] sm:$0xff] %vm265, -inf
        %268 = vst.msk [vmem:[#allocation2 + $0x10] sm:$0xff] %vm265, -inf
        %269 = vst.msk [vmem:[#allocation2 + $0x18] sm:$0xff] %vm265, -inf
        %270 = vst.msk [vmem:[#allocation3] sm:$0xff] %vm265, 0.0
        %271 = vst.msk [vmem:[#allocation3 + $0x8] sm:$0xff] %vm265, 0.0
        %272 = vst.msk [vmem:[#allocation3 + $0x10] sm:$0xff] %vm265, 0.0
        %273 = vst.msk [vmem:[#allocation3 + $0x18] sm:$0xff] %vm265, 0.0
        %vm274 = vcmask 130048
        %275 = vst.msk [vmem:[#allocation4] sm:$0xff] %vm274, 0.0
        %276 = vst.msk [vmem:[#allocation4 + $0x8] sm:$0xff] %vm274, 0.0
        %277 = vst.msk [vmem:[#allocation4 + $0x10] sm:$0xff] %vm274, 0.0
        %278 = vst.msk [vmem:[#allocation4 + $0x18] sm:$0xff] %vm274, 0.0
      $region36: #{residual_attention_block.5} parent=31 // pred_fallthru
        _
      %v279 = vld [vmem:[%s238] sm:$0xf]
      %v280 = vunpack.c.l.bf16 %v279
      %282 = vrot.lane.b32.xlu0 %v280, 112
      %v283 = vpop.permute.xlu0 %282
      %285 = vrot.lane.b32.xlu0 %v280, 96
      %v286 = vpop.permute.xlu0 %285
      %288 = vrot.lane.b32.xlu0 %v280, 80
      %v289 = vpop.permute.xlu0 %288
      %v291 = vcombine.low %v280, %v286
      %v292 = vcombine.high %v280, %v286
      %v294 = vunpack.c.l.s4 1983009808
      %v295 = vunpack.c.0.s8 %v294
      %v296 = vlaneseq
      %v297 = vshrl.u32 %v296, 7
      %v298 = vsub.s32 %v295, %v297
      %v299 = vrot.slane %v291, %v298
      %v301 = vunpack.c.l.s4 1983009808
      %v302 = vunpack.c.0.s8 %v301
      %v303 = vlaneseq
      %v304 = vshrl.u32 %v303, 7
      %v305 = vsub.s32 %v302, %v304
      %v306 = vrot.slane %v292, %v305
      %v307 = vcombine.low %v283, %v289
      %v308 = vcombine.high %v283, %v289
      %v310 = vunpack.c.l.s4 1983009808
      %v311 = vunpack.c.0.s8 %v310
      %v312 = vlaneseq
      %v313 = vshrl.u32 %v312, 7
      %v314 = vsub.s32 %v311, %v313
      %v315 = vrot.slane %v307, %v314
      %v317 = vunpack.c.l.s4 1983009808
      %v318 = vunpack.c.0.s8 %v317
      %v319 = vlaneseq
      %v320 = vshrl.u32 %v319, 7
      %v321 = vsub.s32 %v318, %v320
      %v322 = vrot.slane %v308, %v321
      %v323 = vcombine.low %v299, %v315
      %v324 = vcombine.high %v299, %v315
      %v326 = vunpack.c.l.s4 1934713408
      %v327 = vunpack.c.0.s8 %v326
      %v328 = vlaneseq
      %v329 = vshrl.u32 %v328, 7
      %v330 = vsub.s32 %v327, %v329
      %v331 = vrot.slane %v323, %v330
      %v333 = vunpack.c.l.s4 1934713408
      %v334 = vunpack.c.0.s8 %v333
      %v335 = vlaneseq
      %v336 = vshrl.u32 %v335, 7
      %v337 = vsub.s32 %v334, %v336
      %v338 = vrot.slane %v324, %v337
      %v339 = vcombine.low %v306, %v322
      %v340 = vcombine.high %v306, %v322
      %v342 = vunpack.c.l.s4 1934713408
      %v343 = vunpack.c.0.s8 %v342
      %v344 = vlaneseq
      %v345 = vshrl.u32 %v344, 7
      %v346 = vsub.s32 %v343, %v345
      %v347 = vrot.slane %v339, %v346
      %v349 = vunpack.c.l.s4 1934713408
      %v350 = vunpack.c.0.s8 %v349
      %v351 = vlaneseq
      %v352 = vshrl.u32 %v351, 7
      %v353 = vsub.s32 %v350, %v352
      %v354 = vrot.slane %v340, %v353
      %v355 = vcombine.high %v331, 0.0
      %v356 = vcombine.high %v338, 0.0
      %v357 = vcombine.high %v347, 0.0
      %v358 = vcombine.high %v354, 0.0
      %v359 = vcombine.low %v331, %v338
      %v361 = vunpack.c.l.s4 1983009808
      %v362 = vunpack.c.0.s8 %v361
      %v363 = vlaneseq
      %v364 = vshrl.u32 %v363, 7
      %v365 = vsub.s32 %v362, %v364
      %v366 = vrot.slane %v359, %v365
      %v367 = vcombine.low %v355, %v356
      %v369 = vunpack.c.l.s4 1983009808
      %v370 = vunpack.c.0.s8 %v369
      %v371 = vlaneseq
      %v372 = vshrl.u32 %v371, 7
      %v373 = vsub.s32 %v370, %v372
      %v374 = vrot.slane %v367, %v373
      %v375 = vcombine.low %v347, %v354
      %v377 = vunpack.c.l.s4 1983009808
      %v378 = vunpack.c.0.s8 %v377
      %v379 = vlaneseq
      %v380 = vshrl.u32 %v379, 7
      %v381 = vsub.s32 %v378, %v380
      %v382 = vrot.slane %v375, %v381
      %v383 = vcombine.low %v357, %v358
      %v385 = vunpack.c.l.s4 1983009808
      %v386 = vunpack.c.0.s8 %v385
      %v387 = vlaneseq
      %v388 = vshrl.u32 %v387, 7
      %v389 = vsub.s32 %v386, %v388
      %v390 = vrot.slane %v383, %v389
      %v391 = vcombine.low %v366, %v374
      %v392 = vcombine.high %v366, %v374
      %v394 = vunpack.c.l.s4 1934713408
      %v395 = vunpack.c.0.s8 %v394
      %v396 = vlaneseq
      %v397 = vshrl.u32 %v396, 7
      %v398 = vsub.s32 %v395, %v397
      %v399 = vrot.slane %v391, %v398
      %v401 = vunpack.c.l.s4 1934713408
      %v402 = vunpack.c.0.s8 %v401
      %v403 = vlaneseq
      %v404 = vshrl.u32 %v403, 7
      %v405 = vsub.s32 %v402, %v404
      %v406 = vrot.slane %v392, %v405
      %v407 = vcombine.low %v382, %v390
      %v408 = vcombine.high %v382, %v390
      %v410 = vunpack.c.l.s4 1934713408
      %v411 = vunpack.c.0.s8 %v410
      %v412 = vlaneseq
      %v413 = vshrl.u32 %v412, 7
      %v414 = vsub.s32 %v411, %v413
      %v415 = vrot.slane %v407, %v414
      %v417 = vunpack.c.l.s4 1934713408
      %v418 = vunpack.c.0.s8 %v417
      %v419 = vlaneseq
      %v420 = vshrl.u32 %v419, 7
      %v421 = vsub.s32 %v418, %v420
      %v422 = vrot.slane %v408, %v421
      %v423 = vcombine.low %v399, %v415
      %v424 = vcombine.high %v399, %v415
      %v425 = vcombine.low %v406, %v422
      %v426 = vcombine.high %v406, %v422
      %v427 = vld [vmem:[%s245] sm:$0xf]
      %v428 = vunpack.c.l.bf16 %v427
      %430 = vrot.lane.b32.xlu0 %v428, 112
      %v431 = vpop.permute.xlu0 %430
      %433 = vrot.lane.b32.xlu0 %v428, 96
      %v434 = vpop.permute.xlu0 %433
      %436 = vrot.lane.b32.xlu0 %v428, 80
      %v437 = vpop.permute.xlu0 %436
      %v439 = vcombine.low %v428, %v434
      %v440 = vcombine.high %v428, %v434
      %v442 = vunpack.c.l.s4 1983009808
      %v443 = vunpack.c.0.s8 %v442
      %v444 = vlaneseq
      %v445 = vshrl.u32 %v444, 7
      %v446 = vsub.s32 %v443, %v445
      %v447 = vrot.slane %v439, %v446
      %v449 = vunpack.c.l.s4 1983009808
      %v450 = vunpack.c.0.s8 %v449
      %v451 = vlaneseq
      %v452 = vshrl.u32 %v451, 7
      %v453 = vsub.s32 %v450, %v452
      %v454 = vrot.slane %v440, %v453
      %v455 = vcombine.low %v431, %v437
      %v456 = vcombine.high %v431, %v437
      %v458 = vunpack.c.l.s4 1983009808
      %v459 = vunpack.c.0.s8 %v458
      %v460 = vlaneseq
      %v461 = vshrl.u32 %v460, 7
      %v462 = vsub.s32 %v459, %v461
      %v463 = vrot.slane %v455, %v462
      %v465 = vunpack.c.l.s4 1983009808
      %v466 = vunpack.c.0.s8 %v465
      %v467 = vlaneseq
      %v468 = vshrl.u32 %v467, 7
      %v469 = vsub.s32 %v466, %v468
      %v470 = vrot.slane %v456, %v469
      %v471 = vcombine.low %v447, %v463
      %v472 = vcombine.high %v447, %v463
      %v474 = vunpack.c.l.s4 1934713408
      %v475 = vunpack.c.0.s8 %v474
      %v476 = vlaneseq
      %v477 = vshrl.u32 %v476, 7
      %v478 = vsub.s32 %v475, %v477
      %v479 = vrot.slane %v471, %v478
      %v481 = vunpack.c.l.s4 1934713408
      %v482 = vunpack.c.0.s8 %v481
      %v483 = vlaneseq
      %v484 = vshrl.u32 %v483, 7
      %v485 = vsub.s32 %v482, %v484
      %v486 = vrot.slane %v472, %v485
      %v487 = vcombine.low %v454, %v470
      %v488 = vcombine.high %v454, %v470
      %v490 = vunpack.c.l.s4 1934713408
      %v491 = vunpack.c.0.s8 %v490
      %v492 = vlaneseq
      %v493 = vshrl.u32 %v492, 7
      %v494 = vsub.s32 %v491, %v493
      %v495 = vrot.slane %v487, %v494
      %v497 = vunpack.c.l.s4 1934713408
      %v498 = vunpack.c.0.s8 %v497
      %v499 = vlaneseq
      %v500 = vshrl.u32 %v499, 7
      %v501 = vsub.s32 %v498, %v500
      %v502 = vrot.slane %v488, %v501
      %v503 = vcombine.high %v479, 0.0
      %v504 = vcombine.high %v486, 0.0
      %v505 = vcombine.high %v495, 0.0
      %v506 = vcombine.high %v502, 0.0
      %v507 = vcombine.low %v479, %v486
      %v509 = vunpack.c.l.s4 1983009808
      %v510 = vunpack.c.0.s8 %v509
      %v511 = vlaneseq
      %v512 = vshrl.u32 %v511, 7
      %v513 = vsub.s32 %v510, %v512
      %v514 = vrot.slane %v507, %v513
      %v515 = vcombine.low %v503, %v504
      %v517 = vunpack.c.l.s4 1983009808
      %v518 = vunpack.c.0.s8 %v517
      %v519 = vlaneseq
      %v520 = vshrl.u32 %v519, 7
      %v521 = vsub.s32 %v518, %v520
      %v522 = vrot.slane %v515, %v521
      %v523 = vcombine.low %v495, %v502
      %v525 = vunpack.c.l.s4 1983009808
      %v526 = vunpack.c.0.s8 %v525
      %v527 = vlaneseq
      %v528 = vshrl.u32 %v527, 7
      %v529 = vsub.s32 %v526, %v528
      %v530 = vrot.slane %v523, %v529
      %v531 = vcombine.low %v505, %v506
      %v533 = vunpack.c.l.s4 1983009808
      %v534 = vunpack.c.0.s8 %v533
      %v535 = vlaneseq
      %v536 = vshrl.u32 %v535, 7
      %v537 = vsub.s32 %v534, %v536
      %v538 = vrot.slane %v531, %v537
      %v539 = vcombine.low %v514, %v522
      %v540 = vcombine.high %v514, %v522
      %v542 = vunpack.c.l.s4 1934713408
      %v543 = vunpack.c.0.s8 %v542
      %v544 = vlaneseq
      %v545 = vshrl.u32 %v544, 7
      %v546 = vsub.s32 %v543, %v545
      %v547 = vrot.slane %v539, %v546
      %v549 = vunpack.c.l.s4 1934713408
      %v550 = vunpack.c.0.s8 %v549
      %v551 = vlaneseq
      %v552 = vshrl.u32 %v551, 7
      %v553 = vsub.s32 %v550, %v552
      %v554 = vrot.slane %v540, %v553
      %v555 = vcombine.low %v530, %v538
      %v556 = vcombine.high %v530, %v538
      %v558 = vunpack.c.l.s4 1934713408
      %v559 = vunpack.c.0.s8 %v558
      %v560 = vlaneseq
      %v561 = vshrl.u32 %v560, 7
      %v562 = vsub.s32 %v559, %v561
      %v563 = vrot.slane %v555, %v562
      %v565 = vunpack.c.l.s4 1934713408
      %v566 = vunpack.c.0.s8 %v565
      %v567 = vlaneseq
      %v568 = vshrl.u32 %v567, 7
      %v569 = vsub.s32 %v566, %v568
      %v570 = vrot.slane %v556, %v569
      %v571 = vcombine.low %v547, %v563
      %v572 = vcombine.high %v547, %v563
      %v573 = vcombine.low %v554, %v570
      %v574 = vcombine.high %v554, %v570
      %v575 = vld [vmem:[%s252] sm:$0xf]
      %v576 = vunpack.c.l.bf16 %v575
      %578 = vrot.lane.b32.xlu0 %v576, 112
      %v579 = vpop.permute.xlu0 %578
      %581 = vrot.lane.b32.xlu0 %v576, 96
      %v582 = vpop.permute.xlu0 %581
      %584 = vrot.lane.b32.xlu0 %v576, 80
      %v585 = vpop.permute.xlu0 %584
      %v587 = vcombine.low %v576, %v582
      %v588 = vcombine.high %v576, %v582
      %v590 = vunpack.c.l.s4 1983009808
      %v591 = vunpack.c.0.s8 %v590
      %v592 = vlaneseq
      %v593 = vshrl.u32 %v592, 7
      %v594 = vsub.s32 %v591, %v593
      %v595 = vrot.slane %v587, %v594
      %v597 = vunpack.c.l.s4 1983009808
      %v598 = vunpack.c.0.s8 %v597
      %v599 = vlaneseq
      %v600 = vshrl.u32 %v599, 7
      %v601 = vsub.s32 %v598, %v600
      %v602 = vrot.slane %v588, %v601
      %v603 = vcombine.low %v579, %v585
      %v604 = vcombine.high %v579, %v585
      %v606 = vunpack.c.l.s4 1983009808
      %v607 = vunpack.c.0.s8 %v606
      %v608 = vlaneseq
      %v609 = vshrl.u32 %v608, 7
      %v610 = vsub.s32 %v607, %v609
      %v611 = vrot.slane %v603, %v610
      %v613 = vunpack.c.l.s4 1983009808
      %v614 = vunpack.c.0.s8 %v613
      %v615 = vlaneseq
      %v616 = vshrl.u32 %v615, 7
      %v617 = vsub.s32 %v614, %v616
      %v618 = vrot.slane %v604, %v617
      %v619 = vcombine.low %v595, %v611
      %v620 = vcombine.high %v595, %v611
      %v622 = vunpack.c.l.s4 1934713408
      %v623 = vunpack.c.0.s8 %v622
      %v624 = vlaneseq
      %v625 = vshrl.u32 %v624, 7
      %v626 = vsub.s32 %v623, %v625
      %v627 = vrot.slane %v619, %v626
      %v629 = vunpack.c.l.s4 1934713408
      %v630 = vunpack.c.0.s8 %v629
      %v631 = vlaneseq
      %v632 = vshrl.u32 %v631, 7
      %v633 = vsub.s32 %v630, %v632
      %v634 = vrot.slane %v620, %v633
      %v635 = vcombine.low %v602, %v618
      %v636 = vcombine.high %v602, %v618
      %v638 = vunpack.c.l.s4 1934713408
      %v639 = vunpack.c.0.s8 %v638
      %v640 = vlaneseq
      %v641 = vshrl.u32 %v640, 7
      %v642 = vsub.s32 %v639, %v641
      %v643 = vrot.slane %v635, %v642
      %v645 = vunpack.c.l.s4 1934713408
      %v646 = vunpack.c.0.s8 %v645
      %v647 = vlaneseq
      %v648 = vshrl.u32 %v647, 7
      %v649 = vsub.s32 %v646, %v648
      %v650 = vrot.slane %v636, %v649
      %v651 = vcombine.high %v627, 0.0
      %v652 = vcombine.high %v634, 0.0
      %v653 = vcombine.high %v643, 0.0
      %v654 = vcombine.high %v650, 0.0
      %v655 = vcombine.low %v627, %v634
      %v657 = vunpack.c.l.s4 1983009808
      %v658 = vunpack.c.0.s8 %v657
      %v659 = vlaneseq
      %v660 = vshrl.u32 %v659, 7
      %v661 = vsub.s32 %v658, %v660
      %v662 = vrot.slane %v655, %v661
      %v663 = vcombine.low %v651, %v652
      %v665 = vunpack.c.l.s4 1983009808
      %v666 = vunpack.c.0.s8 %v665
      %v667 = vlaneseq
      %v668 = vshrl.u32 %v667, 7
      %v669 = vsub.s32 %v666, %v668
      %v670 = vrot.slane %v663, %v669
      %v671 = vcombine.low %v643, %v650
      %v673 = vunpack.c.l.s4 1983009808
      %v674 = vunpack.c.0.s8 %v673
      %v675 = vlaneseq
      %v676 = vshrl.u32 %v675, 7
      %v677 = vsub.s32 %v674, %v676
      %v678 = vrot.slane %v671, %v677
      %v679 = vcombine.low %v653, %v654
      %v681 = vunpack.c.l.s4 1983009808
      %v682 = vunpack.c.0.s8 %v681
      %v683 = vlaneseq
      %v684 = vshrl.u32 %v683, 7
      %v685 = vsub.s32 %v682, %v684
      %v686 = vrot.slane %v679, %v685
      %v687 = vcombine.low %v662, %v670
      %v688 = vcombine.high %v662, %v670
      %v690 = vunpack.c.l.s4 1934713408
      %v691 = vunpack.c.0.s8 %v690
      %v692 = vlaneseq
      %v693 = vshrl.u32 %v692, 7
      %v694 = vsub.s32 %v691, %v693
      %v695 = vrot.slane %v687, %v694
      %v697 = vunpack.c.l.s4 1934713408
      %v698 = vunpack.c.0.s8 %v697
      %v699 = vlaneseq
      %v700 = vshrl.u32 %v699, 7
      %v701 = vsub.s32 %v698, %v700
      %v702 = vrot.slane %v688, %v701
      %v703 = vcombine.low %v678, %v686
      %v704 = vcombine.high %v678, %v686
      %v706 = vunpack.c.l.s4 1934713408
      %v707 = vunpack.c.0.s8 %v706
      %v708 = vlaneseq
      %v709 = vshrl.u32 %v708, 7
      %v710 = vsub.s32 %v707, %v709
      %v711 = vrot.slane %v703, %v710
      %v713 = vunpack.c.l.s4 1934713408
      %v714 = vunpack.c.0.s8 %v713
      %v715 = vlaneseq
      %v716 = vshrl.u32 %v715, 7
      %v717 = vsub.s32 %v714, %v716
      %v718 = vrot.slane %v704, %v717
      %v719 = vcombine.low %v695, %v711
      %v720 = vcombine.high %v695, %v711
      %v721 = vcombine.low %v702, %v718
      %v722 = vcombine.high %v702, %v718
      %v723 = vpack.c.bf16 %v423, %v423
      %v724 = vpack.c.bf16 %v424, %v424
      %v725 = vpack.c.bf16 %v425, %v425
      %v726 = vpack.c.bf16 %v426, %v426
      %v727 = vpack.c.bf16 %v571, %v571
      %v728 = vpack.c.bf16 %v572, %v572
      %v729 = vpack.c.bf16 %v573, %v573
      %v730 = vpack.c.bf16 %v574, %v574
      %v731 = vpack.c.bf16 %v719, %v719
      %v732 = vpack.c.bf16 %v720, %v720
      %v733 = vpack.c.bf16 %v721, %v721
      %v734 = vpack.c.bf16 %v722, %v722
      %vm735 = vcmask 130048
      %v737 = vsel %vm735, %v723, 0
      %v740 = vsel %vm735, %v727, 0
      %742 = vmatprep.subr.bf16.mxu0 0
      %743 = vmatpush1.bf16.xpose.msra.mxu0 0
      %744 = vmatprep.subr.bf16.mxu0 0
      %745 = vmatpush1.bf16.xpose.msra.mxu0 0
      %746 = vmatprep.subr.bf16.mxu0 0
      %747 = vmatpush1.bf16.xpose.msra.mxu0 0
      %748 = vmatprep.subr.bf16.mxu0 0
      %749 = vmatpush1.bf16.xpose.msra.mxu0 0
      %750 = vmatprep.subr.bf16.mxu0 0
      %751 = vmatpush1.bf16.xpose.msra.mxu0 0
      %752 = vmatprep.subr.bf16.mxu0 0
      %753 = vmatpush1.bf16.xpose.msra.mxu0 0
      %754 = vmatprep.subr.bf16.mxu0 0
      %755 = vmatpush1.bf16.xpose.msra.mxu0 0
      %756 = vmatprep.subr.bf16.mxu0 0
      %757 = vmatpush1.bf16.xpose.msra.mxu0 %v740
      %758 = vmatprep.subr.bf16.mxu0 0
      %759 = vmatpush2.bf16.xpose.msra.mxu0 0
      %760 = vmatprep.subr.bf16.mxu0 0
      %761 = vmatpush2.bf16.xpose.msra.mxu0 0
      %762 = vmatprep.subr.bf16.mxu0 0
      %763 = vmatpush2.bf16.xpose.msra.mxu0 0
      %764 = vmatprep.subr.bf16.mxu0 0
      %765 = vmatpush2.bf16.xpose.msra.mxu0 0
      %766 = vmatprep.subr.bf16.mxu0 0
      %767 = vmatpush2.bf16.xpose.msra.mxu0 0
      %768 = vmatprep.subr.bf16.mxu0 0
      %769 = vmatpush2.bf16.xpose.msra.mxu0 0
      %770 = vmatprep.subr.bf16.mxu0 0
      %771 = vmatpush2.bf16.xpose.msra.mxu0 0
      %772 = vmatprep.subr.bf16.mxu0 0
      %773 = vmatpush2.bf16.xpose.msra.mxu0 0
      %774 = vmatprep.mubr.bf16.mxu0 0
      %775 = vmatmul.mubr.bf16.gmra.mxu0 %v737
      %v776 = vpop.f32.mrf.mxu0
      %v777 = vadd.f32 0.0, %v776
      %v778 = vpop.f32.mrf.mxu0
      %v779 = vpop.f32.mrf.mxu0
      %v780 = vpop.f32.mrf.mxu0
      %781 = vdwg.mxu0
      %v783 = vsel %vm735, %v724, 0
      %v786 = vsel %vm735, %v728, 0
      %788 = vmatprep.subr.bf16.mxu0 0
      %789 = vmatpush1.bf16.xpose.msra.mxu0 0
      %790 = vmatprep.subr.bf16.mxu0 0
      %791 = vmatpush1.bf16.xpose.msra.mxu0 0
      %792 = vmatprep.subr.bf16.mxu0 0
      %793 = vmatpush1.bf16.xpose.msra.mxu0 0
      %794 = vmatprep.subr.bf16.mxu0 0
      %795 = vmatpush1.bf16.xpose.msra.mxu0 0
      %796 = vmatprep.subr.bf16.mxu0 0
      %797 = vmatpush1.bf16.xpose.msra.mxu0 0
      %798 = vmatprep.subr.bf16.mxu0 0
      %799 = vmatpush1.bf16.xpose.msra.mxu0 0
      %800 = vmatprep.subr.bf16.mxu0 0
      %801 = vmatpush1.bf16.xpose.msra.mxu0 0
      %802 = vmatprep.subr.bf16.mxu0 0
      %803 = vmatpush1.bf16.xpose.msra.mxu0 %v786
      %804 = vmatprep.subr.bf16.mxu0 0
      %805 = vmatpush2.bf16.xpose.msra.mxu0 0
      %806 = vmatprep.subr.bf16.mxu0 0
      %807 = vmatpush2.bf16.xpose.msra.mxu0 0
      %808 = vmatprep.subr.bf16.mxu0 0
      %809 = vmatpush2.bf16.xpose.msra.mxu0 0
      %810 = vmatprep.subr.bf16.mxu0 0
      %811 = vmatpush2.bf16.xpose.msra.mxu0 0
      %812 = vmatprep.subr.bf16.mxu0 0
      %813 = vmatpush2.bf16.xpose.msra.mxu0 0
      %814 = vmatprep.subr.bf16.mxu0 0
      %815 = vmatpush2.bf16.xpose.msra.mxu0 0
      %816 = vmatprep.subr.bf16.mxu0 0
      %817 = vmatpush2.bf16.xpose.msra.mxu0 0
      %818 = vmatprep.subr.bf16.mxu0 0
      %819 = vmatpush2.bf16.xpose.msra.mxu0 0
      %820 = vmatprep.mubr.bf16.mxu0 0
      %821 = vmatmul.mubr.bf16.gmra.mxu0 %v783
      %v822 = vpop.f32.mrf.mxu0
      %v823 = vadd.f32 0.0, %v822
      %v824 = vpop.f32.mrf.mxu0
      %v825 = vpop.f32.mrf.mxu0
      %v826 = vpop.f32.mrf.mxu0
      %827 = vdwg.mxu0
      %v829 = vsel %vm735, %v725, 0
      %v832 = vsel %vm735, %v729, 0
      %834 = vmatprep.subr.bf16.mxu0 0
      %835 = vmatpush1.bf16.xpose.msra.mxu0 0
      %836 = vmatprep.subr.bf16.mxu0 0
      %837 = vmatpush1.bf16.xpose.msra.mxu0 0
      %838 = vmatprep.subr.bf16.mxu0 0
      %839 = vmatpush1.bf16.xpose.msra.mxu0 0
      %840 = vmatprep.subr.bf16.mxu0 0
      %841 = vmatpush1.bf16.xpose.msra.mxu0 0
      %842 = vmatprep.subr.bf16.mxu0 0
      %843 = vmatpush1.bf16.xpose.msra.mxu0 0
      %844 = vmatprep.subr.bf16.mxu0 0
      %845 = vmatpush1.bf16.xpose.msra.mxu0 0
      %846 = vmatprep.subr.bf16.mxu0 0
      %847 = vmatpush1.bf16.xpose.msra.mxu0 0
      %848 = vmatprep.subr.bf16.mxu0 0
      %849 = vmatpush1.bf16.xpose.msra.mxu0 %v832
      %850 = vmatprep.subr.bf16.mxu0 0
      %851 = vmatpush2.bf16.xpose.msra.mxu0 0
      %852 = vmatprep.subr.bf16.mxu0 0
      %853 = vmatpush2.bf16.xpose.msra.mxu0 0
      %854 = vmatprep.subr.bf16.mxu0 0
      %855 = vmatpush2.bf16.xpose.msra.mxu0 0
      %856 = vmatprep.subr.bf16.mxu0 0
      %857 = vmatpush2.bf16.xpose.msra.mxu0 0
      %858 = vmatprep.subr.bf16.mxu0 0
      %859 = vmatpush2.bf16.xpose.msra.mxu0 0
      %860 = vmatprep.subr.bf16.mxu0 0
      %861 = vmatpush2.bf16.xpose.msra.mxu0 0
      %862 = vmatprep.subr.bf16.mxu0 0
      %863 = vmatpush2.bf16.xpose.msra.mxu0 0
      %864 = vmatprep.subr.bf16.mxu0 0
      %865 = vmatpush2.bf16.xpose.msra.mxu0 0
      %866 = vmatprep.mubr.bf16.mxu0 0
      %867 = vmatmul.mubr.bf16.gmra.mxu0 %v829
      %v868 = vpop.f32.mrf.mxu0
      %v869 = vadd.f32 0.0, %v868
      %v870 = vpop.f32.mrf.mxu0
      %v871 = vpop.f32.mrf.mxu0
      %v872 = vpop.f32.mrf.mxu0
      %873 = vdwg.mxu0
      %v875 = vsel %vm735, %v726, 0
      %v878 = vsel %vm735, %v730, 0
      %880 = vmatprep.subr.bf16.mxu0 0
      %881 = vmatpush1.bf16.xpose.msra.mxu0 0
      %882 = vmatprep.subr.bf16.mxu0 0
      %883 = vmatpush1.bf16.xpose.msra.mxu0 0
      %884 = vmatprep.subr.bf16.mxu0 0
      %885 = vmatpush1.bf16.xpose.msra.mxu0 0
      %886 = vmatprep.subr.bf16.mxu0 0
      %887 = vmatpush1.bf16.xpose.msra.mxu0 0
      %888 = vmatprep.subr.bf16.mxu0 0
      %889 = vmatpush1.bf16.xpose.msra.mxu0 0
      %890 = vmatprep.subr.bf16.mxu0 0
      %891 = vmatpush1.bf16.xpose.msra.mxu0 0
      %892 = vmatprep.subr.bf16.mxu0 0
      %893 = vmatpush1.bf16.xpose.msra.mxu0 0
      %894 = vmatprep.subr.bf16.mxu0 0
      %895 = vmatpush1.bf16.xpose.msra.mxu0 %v878
      %896 = vmatprep.subr.bf16.mxu0 0
      %897 = vmatpush2.bf16.xpose.msra.mxu0 0
      %898 = vmatprep.subr.bf16.mxu0 0
      %899 = vmatpush2.bf16.xpose.msra.mxu0 0
      %900 = vmatprep.subr.bf16.mxu0 0
      %901 = vmatpush2.bf16.xpose.msra.mxu0 0
      %902 = vmatprep.subr.bf16.mxu0 0
      %903 = vmatpush2.bf16.xpose.msra.mxu0 0
      %904 = vmatprep.subr.bf16.mxu0 0
      %905 = vmatpush2.bf16.xpose.msra.mxu0 0
      %906 = vmatprep.subr.bf16.mxu0 0
      %907 = vmatpush2.bf16.xpose.msra.mxu0 0
      %908 = vmatprep.subr.bf16.mxu0 0
      %909 = vmatpush2.bf16.xpose.msra.mxu0 0
      %910 = vmatprep.subr.bf16.mxu0 0
      %911 = vmatpush2.bf16.xpose.msra.mxu0 0
      %912 = vmatprep.mubr.bf16.mxu0 0
      %913 = vmatmul.mubr.bf16.gmra.mxu0 %v875
      %v914 = vpop.f32.mrf.mxu0
      %v915 = vadd.f32 0.0, %v914
      %v916 = vpop.f32.mrf.mxu0
      %v917 = vpop.f32.mrf.mxu0
      %v918 = vpop.f32.mrf.mxu0
      %919 = vdwg.mxu0
      %v920 = vld [vmem:[#allocation2] sm:$0xff]
      %v921 = vld [vmem:[#allocation2 + $0x8] sm:$0xff]
      %v922 = vld [vmem:[#allocation2 + $0x10] sm:$0xff]
      %v923 = vld [vmem:[#allocation2 + $0x18] sm:$0xff]
      %vm924 = vcmask 64512
      %v925 = vsel %vm924, %v777, -inf
      %926 = vmax.xlane.f32.xlu0 %v925
      %v927 = vpop.xlane.xlu0 %926
      %v928 = vsel %vm924, %v823, -inf
      %929 = vmax.xlane.f32.xlu0 %v928
      %v930 = vpop.xlane.xlu0 %929
      %v931 = vsel %vm924, %v869, -inf
      %932 = vmax.xlane.f32.xlu0 %v931
      %v933 = vpop.xlane.xlu0 %932
      %v934 = vsel %vm924, %v915, -inf
      %935 = vmax.xlane.f32.xlu0 %v934
      %v936 = vpop.xlane.xlu0 %935
      %v937 = vmax.f32 %v920, %v927
      %v938 = vmax.f32 %v921, %v930
      %v939 = vmax.f32 %v922, %v933
      %v940 = vmax.f32 %v923, %v936
      %v941 = vsub.f32 %v920, %v937
      %v942 = vsub.f32 %v921, %v938
      %v943 = vsub.f32 %v922, %v939
      %v944 = vsub.f32 %v923, %v940
      %v945 = vmul.f32 %v941, 1.442695
      %v946 = vpow.pop %v945
      %v947 = vmul.f32 %v942, 1.442695
      %v948 = vpow.pop %v947
      %v949 = vmul.f32 %v943, 1.442695
      %v950 = vpow.pop %v949
      %v951 = vmul.f32 %v944, 1.442695
      %v952 = vpow.pop %v951
      %954 = vset.pattern.permute.xlu0 0
      %955 = vperm.xlu0 %954, %v937
      %v956 = vpop.permute.xlu0 %955
      %959 = vset.pattern.permute.xlu0 0
      %960 = vperm.xlu0 %959, %v938
      %v961 = vpop.permute.xlu0 %960
      %964 = vset.pattern.permute.xlu0 0
      %965 = vperm.xlu0 %964, %v939
      %v966 = vpop.permute.xlu0 %965
      %969 = vset.pattern.permute.xlu0 0
      %970 = vperm.xlu0 %969, %v940
      %v971 = vpop.permute.xlu0 %970
      %v973 = vsub.f32 %v777, %v956
      %v974 = vsub.f32 %v823, %v961
      %v975 = vsub.f32 %v869, %v966
      %v976 = vsub.f32 %v915, %v971
      %v977 = vmul.f32 %v973, 1.442695
      %v978 = vpow.pop %v977
      %v979 = vmul.f32 %v974, 1.442695
      %v980 = vpow.pop %v979
      %v981 = vmul.f32 %v975, 1.442695
      %v982 = vpow.pop %v981
      %v983 = vmul.f32 %v976, 1.442695
      %v984 = vpow.pop %v983
      %v985 = vld [vmem:[#allocation3] sm:$0xff]
      %v986 = vld [vmem:[#allocation3 + $0x8] sm:$0xff]
      %v987 = vld [vmem:[#allocation3 + $0x10] sm:$0xff]
      %v988 = vld [vmem:[#allocation3 + $0x18] sm:$0xff]
      %v989 = vmul.f32 %v946, %v985
      %v990 = vmul.f32 %v948, %v986
      %v991 = vmul.f32 %v950, %v987
      %v992 = vmul.f32 %v952, %v988
      %v993 = vsel %vm924, %v978, 0.0
      %994 = vadd.xlane.f32.xlu0 %v993
      %v995 = vpop.xlane.xlu0 %994
      %v996 = vsel %vm924, %v980, 0.0
      %997 = vadd.xlane.f32.xlu0 %v996
      %v998 = vpop.xlane.xlu0 %997
      %v999 = vsel %vm924, %v982, 0.0
      %1000 = vadd.xlane.f32.xlu0 %v999
      %v1001 = vpop.xlane.xlu0 %1000
      %v1002 = vsel %vm924, %v984, 0.0
      %1003 = vadd.xlane.f32.xlu0 %v1002
      %v1004 = vpop.xlane.xlu0 %1003
      %v1005 = vadd.f32 %v989, %v995
      %v1006 = vadd.f32 %v990, %v998
      %v1007 = vadd.f32 %v991, %v1001
      %v1008 = vadd.f32 %v992, %v1004
      %vm1009 = vcmask 7168
      %1010 = vst.msk [vmem:[#allocation3] sm:$0xff] %vm1009, %v1005
      %1011 = vst.msk [vmem:[#allocation3 + $0x8] sm:$0xff] %vm1009, %v1006
      %1012 = vst.msk [vmem:[#allocation3 + $0x10] sm:$0xff] %vm1009, %v1007
      %1013 = vst.msk [vmem:[#allocation3 + $0x18] sm:$0xff] %vm1009, %v1008
      %v1014 = vld [vmem:[#allocation4] sm:$0xff]
      %v1015 = vld [vmem:[#allocation4 + $0x8] sm:$0xff]
      %v1016 = vld [vmem:[#allocation4 + $0x10] sm:$0xff]
      %v1017 = vld [vmem:[#allocation4 + $0x18] sm:$0xff]
      %1019 = vset.pattern.permute.xlu0 0
      %1020 = vperm.xlu0 %1019, %v946
      %v1021 = vpop.permute.xlu0 %1020
      %1024 = vset.pattern.permute.xlu0 0
      %1025 = vperm.xlu0 %1024, %v948
      %v1026 = vpop.permute.xlu0 %1025
      %1029 = vset.pattern.permute.xlu0 0
      %1030 = vperm.xlu0 %1029, %v950
      %v1031 = vpop.permute.xlu0 %1030
      %1034 = vset.pattern.permute.xlu0 0
      %1035 = vperm.xlu0 %1034, %v952
      %v1036 = vpop.permute.xlu0 %1035
      %v1038 = vmul.f32 %v1021, %v1014
      %v1039 = vmul.f32 %v1026, %v1015
      %v1040 = vmul.f32 %v1031, %v1016
      %v1041 = vmul.f32 %v1036, %v1017
      %v1042 = vpack.c.bf16 %v978, %v978
      %v1043 = vpack.c.bf16 %v980, %v980
      %v1044 = vpack.c.bf16 %v982, %v982
      %v1045 = vpack.c.bf16 %v984, %v984
      %v1047 = vsel %vm924, %v1042, 0
      %vm1049 = vcmask 1043456
      %v1051 = vsel %vm1049, %v731, 0
      %1053 = vmatprep.subr.bf16.mxu0 0
      %1054 = vmatpush1.bf16.msra.mxu0 0
      %1055 = vmatprep.subr.bf16.mxu0 0
      %1056 = vmatpush1.bf16.msra.mxu0 0
      %1057 = vmatprep.subr.bf16.mxu0 0
      %1058 = vmatpush1.bf16.msra.mxu0 0
      %1059 = vmatprep.subr.bf16.mxu0 0
      %1060 = vmatpush1.bf16.msra.mxu0 0
      %1061 = vmatprep.subr.bf16.mxu0 0
      %1062 = vmatpush1.bf16.msra.mxu0 0
      %1063 = vmatprep.subr.bf16.mxu0 0
      %1064 = vmatpush1.bf16.msra.mxu0 0
      %1065 = vmatprep.subr.bf16.mxu0 0
      %1066 = vmatpush1.bf16.msra.mxu0 0
      %1067 = vmatprep.subr.bf16.mxu0 0
      %1068 = vmatpush1.bf16.msra.mxu0 %v1051
      %1069 = vmatprep.subr.bf16.mxu0 0
      %1070 = vmatpush2.bf16.msra.mxu0 0
      %1071 = vmatprep.subr.bf16.mxu0 0
      %1072 = vmatpush2.bf16.msra.mxu0 0
      %1073 = vmatprep.subr.bf16.mxu0 0
      %1074 = vmatpush2.bf16.msra.mxu0 0
      %1075 = vmatprep.subr.bf16.mxu0 0
      %1076 = vmatpush2.bf16.msra.mxu0 0
      %1077 = vmatprep.subr.bf16.mxu0 0
      %1078 = vmatpush2.bf16.msra.mxu0 0
      %1079 = vmatprep.subr.bf16.mxu0 0
      %1080 = vmatpush2.bf16.msra.mxu0 0
      %1081 = vmatprep.subr.bf16.mxu0 0
      %1082 = vmatpush2.bf16.msra.mxu0 0
      %1083 = vmatprep.subr.bf16.mxu0 0
      %1084 = vmatpush2.bf16.msra.mxu0 0
      %1085 = vmatprep.mubr.bf16.mxu0 0
      %1086 = vmatmul.mubr.bf16.gmra.mxu0 %v1047
      %v1087 = vpop.f32.mrf.mxu0
      %v1088 = vadd.f32 0.0, %v1087
      %v1089 = vpop.f32.mrf.mxu0
      %v1090 = vpop.f32.mrf.mxu0
      %v1091 = vpop.f32.mrf.mxu0
      %1092 = vdwg.mxu0
      %v1094 = vsel %vm924, %v1043, 0
      %v1097 = vsel %vm1049, %v732, 0
      %1099 = vmatprep.subr.bf16.mxu0 0
      %1100 = vmatpush1.bf16.msra.mxu0 0
      %1101 = vmatprep.subr.bf16.mxu0 0
      %1102 = vmatpush1.bf16.msra.mxu0 0
      %1103 = vmatprep.subr.bf16.mxu0 0
      %1104 = vmatpush1.bf16.msra.mxu0 0
      %1105 = vmatprep.subr.bf16.mxu0 0
      %1106 = vmatpush1.bf16.msra.mxu0 0
      %1107 = vmatprep.subr.bf16.mxu0 0
      %1108 = vmatpush1.bf16.msra.mxu0 0
      %1109 = vmatprep.subr.bf16.mxu0 0
      %1110 = vmatpush1.bf16.msra.mxu0 0
      %1111 = vmatprep.subr.bf16.mxu0 0
      %1112 = vmatpush1.bf16.msra.mxu0 0
      %1113 = vmatprep.subr.bf16.mxu0 0
      %1114 = vmatpush1.bf16.msra.mxu0 %v1097
      %1115 = vmatprep.subr.bf16.mxu0 0
      %1116 = vmatpush2.bf16.msra.mxu0 0
      %1117 = vmatprep.subr.bf16.mxu0 0
      %1118 = vmatpush2.bf16.msra.mxu0 0
      %1119 = vmatprep.subr.bf16.mxu0 0
      %1120 = vmatpush2.bf16.msra.mxu0 0
      %1121 = vmatprep.subr.bf16.mxu0 0
      %1122 = vmatpush2.bf16.msra.mxu0 0
      %1123 = vmatprep.subr.bf16.mxu0 0
      %1124 = vmatpush2.bf16.msra.mxu0 0
      %1125 = vmatprep.subr.bf16.mxu0 0
      %1126 = vmatpush2.bf16.msra.mxu0 0
      %1127 = vmatprep.subr.bf16.mxu0 0
      %1128 = vmatpush2.bf16.msra.mxu0 0
      %1129 = vmatprep.subr.bf16.mxu0 0
      %1130 = vmatpush2.bf16.msra.mxu0 0
      %1131 = vmatprep.mubr.bf16.mxu0 0
      %1132 = vmatmul.mubr.bf16.gmra.mxu0 %v1094
      %v1133 = vpop.f32.mrf.mxu0
      %v1134 = vadd.f32 0.0, %v1133
      %v1135 = vpop.f32.mrf.mxu0
      %v1136 = vpop.f32.mrf.mxu0
      %v1137 = vpop.f32.mrf.mxu0
      %1138 = vdwg.mxu0
      %v1140 = vsel %vm924, %v1044, 0
      %v1143 = vsel %vm1049, %v733, 0
      %1145 = vmatprep.subr.bf16.mxu0 0
      %1146 = vmatpush1.bf16.msra.mxu0 0
      %1147 = vmatprep.subr.bf16.mxu0 0
      %1148 = vmatpush1.bf16.msra.mxu0 0
      %1149 = vmatprep.subr.bf16.mxu0 0
      %1150 = vmatpush1.bf16.msra.mxu0 0
      %1151 = vmatprep.subr.bf16.mxu0 0
      %1152 = vmatpush1.bf16.msra.mxu0 0
      %1153 = vmatprep.subr.bf16.mxu0 0
      %1154 = vmatpush1.bf16.msra.mxu0 0
      %1155 = vmatprep.subr.bf16.mxu0 0
      %1156 = vmatpush1.bf16.msra.mxu0 0
      %1157 = vmatprep.subr.bf16.mxu0 0
      %1158 = vmatpush1.bf16.msra.mxu0 0
      %1159 = vmatprep.subr.bf16.mxu0 0
      %1160 = vmatpush1.bf16.msra.mxu0 %v1143
      %1161 = vmatprep.subr.bf16.mxu0 0
      %1162 = vmatpush2.bf16.msra.mxu0 0
      %1163 = vmatprep.subr.bf16.mxu0 0
      %1164 = vmatpush2.bf16.msra.mxu0 0
      %1165 = vmatprep.subr.bf16.mxu0 0
      %1166 = vmatpush2.bf16.msra.mxu0 0
      %1167 = vmatprep.subr.bf16.mxu0 0
      %1168 = vmatpush2.bf16.msra.mxu0 0
      %1169 = vmatprep.subr.bf16.mxu0 0
      %1170 = vmatpush2.bf16.msra.mxu0 0
      %1171 = vmatprep.subr.bf16.mxu0 0
      %1172 = vmatpush2.bf16.msra.mxu0 0
      %1173 = vmatprep.subr.bf16.mxu0 0
      %1174 = vmatpush2.bf16.msra.mxu0 0
      %1175 = vmatprep.subr.bf16.mxu0 0
      %1176 = vmatpush2.bf16.msra.mxu0 0
      %1177 = vmatprep.mubr.bf16.mxu0 0
      %1178 = vmatmul.mubr.bf16.gmra.mxu0 %v1140
      %v1179 = vpop.f32.mrf.mxu0
      %v1180 = vadd.f32 0.0, %v1179
      %v1181 = vpop.f32.mrf.mxu0
      %v1182 = vpop.f32.mrf.mxu0
      %v1183 = vpop.f32.mrf.mxu0
      %1184 = vdwg.mxu0
      %v1186 = vsel %vm924, %v1045, 0
      %v1189 = vsel %vm1049, %v734, 0
      %1191 = vmatprep.subr.bf16.mxu0 0
      %1192 = vmatpush1.bf16.msra.mxu0 0
      %1193 = vmatprep.subr.bf16.mxu0 0
      %1194 = vmatpush1.bf16.msra.mxu0 0
      %1195 = vmatprep.subr.bf16.mxu0 0
      %1196 = vmatpush1.bf16.msra.mxu0 0
      %1197 = vmatprep.subr.bf16.mxu0 0
      %1198 = vmatpush1.bf16.msra.mxu0 0
      %1199 = vmatprep.subr.bf16.mxu0 0
      %1200 = vmatpush1.bf16.msra.mxu0 0
      %1201 = vmatprep.subr.bf16.mxu0 0
      %1202 = vmatpush1.bf16.msra.mxu0 0
      %1203 = vmatprep.subr.bf16.mxu0 0
      %1204 = vmatpush1.bf16.msra.mxu0 0
      %1205 = vmatprep.subr.bf16.mxu0 0
      %1206 = vmatpush1.bf16.msra.mxu0 %v1189
      %1207 = vmatprep.subr.bf16.mxu0 0
      %1208 = vmatpush2.bf16.msra.mxu0 0
      %1209 = vmatprep.subr.bf16.mxu0 0
      %1210 = vmatpush2.bf16.msra.mxu0 0
      %1211 = vmatprep.subr.bf16.mxu0 0
      %1212 = vmatpush2.bf16.msra.mxu0 0
      %1213 = vmatprep.subr.bf16.mxu0 0
      %1214 = vmatpush2.bf16.msra.mxu0 0
      %1215 = vmatprep.subr.bf16.mxu0 0
      %1216 = vmatpush2.bf16.msra.mxu0 0
      %1217 = vmatprep.subr.bf16.mxu0 0
      %1218 = vmatpush2.bf16.msra.mxu0 0
      %1219 = vmatprep.subr.bf16.mxu0 0
      %1220 = vmatpush2.bf16.msra.mxu0 0
      %1221 = vmatprep.subr.bf16.mxu0 0
      %1222 = vmatpush2.bf16.msra.mxu0 0
      %1223 = vmatprep.mubr.bf16.mxu0 0
      %1224 = vmatmul.mubr.bf16.gmra.mxu0 %v1186
      %v1225 = vpop.f32.mrf.mxu0
      %v1226 = vadd.f32 0.0, %v1225
      %v1227 = vpop.f32.mrf.mxu0
      %v1228 = vpop.f32.mrf.mxu0
      %v1229 = vpop.f32.mrf.mxu0
      %1230 = vdwg.mxu0
      %v1231 = vadd.f32 %v1038, %v1088
      %v1232 = vadd.f32 %v1039, %v1134
      %v1233 = vadd.f32 %v1040, %v1180
      %v1234 = vadd.f32 %v1041, %v1226
      %1235 = vst.msk [vmem:[#allocation4] sm:$0xff] %vm735, %v1231
      %1236 = vst.msk [vmem:[#allocation4 + $0x8] sm:$0xff] %vm735, %v1232
      %1237 = vst.msk [vmem:[#allocation4 + $0x10] sm:$0xff] %vm735, %v1233
      %1238 = vst.msk [vmem:[#allocation4 + $0x18] sm:$0xff] %vm735, %v1234
      %1239 = vst.msk [vmem:[#allocation2] sm:$0xff] %vm1009, %v937
      %1240 = vst.msk [vmem:[#allocation2 + $0x8] sm:$0xff] %vm1009, %v938
      %1241 = vst.msk [vmem:[#allocation2 + $0x10] sm:$0xff] %vm1009, %v939
      %1242 = vst.msk [vmem:[#allocation2 + $0x18] sm:$0xff] %vm1009, %v940
      // Predicated region
      $region37: #{residual_attention_block.5} parent=31 // pred_check
        %p1243 = pneg %p261
      $region38: #{residual_attention_block.5} parent=31 // pred_check_branch
        %1245 = sbr.rel (%p1243) target = $region40
      $region39: #{residual_attention_block.5} parent=31 // pred_region
        %v1246 = vld [vmem:[#allocation4] sm:$0xff]
        %v1247 = vld [vmem:[#allocation4 + $0x8] sm:$0xff]
        %v1248 = vld [vmem:[#allocation4 + $0x10] sm:$0xff]
        %v1249 = vld [vmem:[#allocation4 + $0x18] sm:$0xff]
        %v1250 = vld [vmem:[#allocation3] sm:$0xff]
        %v1251 = vld [vmem:[#allocation3 + $0x8] sm:$0xff]
        %v1252 = vld [vmem:[#allocation3 + $0x10] sm:$0xff]
        %v1253 = vld [vmem:[#allocation3 + $0x18] sm:$0xff]
        %v1254 = vrcp.pop %v1250
        %v1255 = vrcp.pop %v1251
        %v1256 = vrcp.pop %v1252
        %v1257 = vrcp.pop %v1253
        %1259 = vset.pattern.permute.xlu0 0
        %1260 = vperm.xlu0 %1259, %v1254
        %v1261 = vpop.permute.xlu0 %1260
        %1264 = vset.pattern.permute.xlu0 0
        %1265 = vperm.xlu0 %1264, %v1255
        %v1266 = vpop.permute.xlu0 %1265
        %1269 = vset.pattern.permute.xlu0 0
        %1270 = vperm.xlu0 %1269, %v1256
        %v1271 = vpop.permute.xlu0 %1270
        %1274 = vset.pattern.permute.xlu0 0
        %1275 = vperm.xlu0 %1274, %v1257
        %v1276 = vpop.permute.xlu0 %1275
        %v1278 = vmul.f32 %v1246, %v1261
        %v1279 = vmul.f32 %v1247, %v1266
        %v1280 = vmul.f32 %v1248, %v1271
        %v1281 = vmul.f32 %v1249, %v1276
        %v1282 = vcombine.low %v1278, %v1280
        %v1283 = vcombine.high %v1278, %v1280
        %v1285 = vunpack.c.l.s4 1983009808
        %v1286 = vunpack.c.0.s8 %v1285
        %v1287 = vlaneseq
        %v1288 = vshrl.u32 %v1287, 7
        %v1289 = vsub.s32 %v1286, %v1288
        %v1290 = vrot.slane %v1282, %v1289
        %v1292 = vunpack.c.l.s4 1983009808
        %v1293 = vunpack.c.0.s8 %v1292
        %v1294 = vlaneseq
        %v1295 = vshrl.u32 %v1294, 7
        %v1296 = vsub.s32 %v1293, %v1295
        %v1297 = vrot.slane %v1283, %v1296
        %v1298 = vcombine.low %v1279, %v1281
        %v1299 = vcombine.high %v1279, %v1281
        %v1301 = vunpack.c.l.s4 1983009808
        %v1302 = vunpack.c.0.s8 %v1301
        %v1303 = vlaneseq
        %v1304 = vshrl.u32 %v1303, 7
        %v1305 = vsub.s32 %v1302, %v1304
        %v1306 = vrot.slane %v1298, %v1305
        %v1308 = vunpack.c.l.s4 1983009808
        %v1309 = vunpack.c.0.s8 %v1308
        %v1310 = vlaneseq
        %v1311 = vshrl.u32 %v1310, 7
        %v1312 = vsub.s32 %v1309, %v1311
        %v1313 = vrot.slane %v1299, %v1312
        %v1314 = vcombine.low %v1290, %v1306
        %v1315 = vcombine.high %v1290, %v1306
        %v1317 = vunpack.c.l.s4 1934713408
        %v1318 = vunpack.c.0.s8 %v1317
        %v1319 = vlaneseq
        %v1320 = vshrl.u32 %v1319, 7
        %v1321 = vsub.s32 %v1318, %v1320
        %v1322 = vrot.slane %v1314, %v1321
        %v1324 = vunpack.c.l.s4 1934713408
        %v1325 = vunpack.c.0.s8 %v1324
        %v1326 = vlaneseq
        %v1327 = vshrl.u32 %v1326, 7
        %v1328 = vsub.s32 %v1325, %v1327
        %v1329 = vrot.slane %v1315, %v1328
        %v1330 = vcombine.low %v1297, %v1313
        %v1331 = vcombine.high %v1297, %v1313
        %v1333 = vunpack.c.l.s4 1934713408
        %v1334 = vunpack.c.0.s8 %v1333
        %v1335 = vlaneseq
        %v1336 = vshrl.u32 %v1335, 7
        %v1337 = vsub.s32 %v1334, %v1336
        %v1338 = vrot.slane %v1330, %v1337
        %v1340 = vunpack.c.l.s4 1934713408
        %v1341 = vunpack.c.0.s8 %v1340
        %v1342 = vlaneseq
        %v1343 = vshrl.u32 %v1342, 7
        %v1344 = vsub.s32 %v1341, %v1343
        %v1345 = vrot.slane %v1331, %v1344
        %v1346 = vcombine.high %v1322, 0.0
        %v1347 = vcombine.high %v1329, 0.0
        %v1348 = vcombine.high %v1338, 0.0
        %v1349 = vcombine.high %v1345, 0.0
        %v1350 = vcombine.low %v1322, %v1329
        %v1352 = vunpack.c.l.s4 1983009808
        %v1353 = vunpack.c.0.s8 %v1352
        %v1354 = vlaneseq
        %v1355 = vshrl.u32 %v1354, 7
        %v1356 = vsub.s32 %v1353, %v1355
        %v1357 = vrot.slane %v1350, %v1356
        %v1358 = vcombine.low %v1346, %v1347
        %v1360 = vunpack.c.l.s4 1983009808
        %v1361 = vunpack.c.0.s8 %v1360
        %v1362 = vlaneseq
        %v1363 = vshrl.u32 %v1362, 7
        %v1364 = vsub.s32 %v1361, %v1363
        %v1365 = vrot.slane %v1358, %v1364
        %v1366 = vcombine.low %v1338, %v1345
        %v1368 = vunpack.c.l.s4 1983009808
        %v1369 = vunpack.c.0.s8 %v1368
        %v1370 = vlaneseq
        %v1371 = vshrl.u32 %v1370, 7
        %v1372 = vsub.s32 %v1369, %v1371
        %v1373 = vrot.slane %v1366, %v1372
        %v1374 = vcombine.low %v1348, %v1349
        %v1376 = vunpack.c.l.s4 1983009808
        %v1377 = vunpack.c.0.s8 %v1376
        %v1378 = vlaneseq
        %v1379 = vshrl.u32 %v1378, 7
        %v1380 = vsub.s32 %v1377, %v1379
        %v1381 = vrot.slane %v1374, %v1380
        %v1382 = vcombine.low %v1357, %v1365
        %v1383 = vcombine.high %v1357, %v1365
        %v1385 = vunpack.c.l.s4 1934713408
        %v1386 = vunpack.c.0.s8 %v1385
        %v1387 = vlaneseq
        %v1388 = vshrl.u32 %v1387, 7
        %v1389 = vsub.s32 %v1386, %v1388
        %v1390 = vrot.slane %v1382, %v1389
        %v1392 = vunpack.c.l.s4 1934713408
        %v1393 = vunpack.c.0.s8 %v1392
        %v1394 = vlaneseq
        %v1395 = vshrl.u32 %v1394, 7
        %v1396 = vsub.s32 %v1393, %v1395
        %v1397 = vrot.slane %v1383, %v1396
        %v1398 = vcombine.low %v1373, %v1381
        %v1399 = vcombine.high %v1373, %v1381
        %v1401 = vunpack.c.l.s4 1934713408
        %v1402 = vunpack.c.0.s8 %v1401
        %v1403 = vlaneseq
        %v1404 = vshrl.u32 %v1403, 7
        %v1405 = vsub.s32 %v1402, %v1404
        %v1406 = vrot.slane %v1398, %v1405
        %v1408 = vunpack.c.l.s4 1934713408
        %v1409 = vunpack.c.0.s8 %v1408
        %v1410 = vlaneseq
        %v1411 = vshrl.u32 %v1410, 7
        %v1412 = vsub.s32 %v1409, %v1411
        %v1413 = vrot.slane %v1399, %v1412
        %v1414 = vcombine.low %v1390, %v1406
        %v1415 = vcombine.high %v1390, %v1406
        %v1416 = vcombine.low %v1397, %v1413
        %v1417 = vcombine.high %v1397, %v1413
        %1419 = vrot.lane.b32.xlu0 %v1415, 16
        %v1420 = vpop.permute.xlu0 %1419
        %1423 = vrot.lane.b32.xlu0 %v1416, 32
        %v1424 = vpop.permute.xlu0 %1423
        %1427 = vrot.lane.b32.xlu0 %v1417, 48
        %v1428 = vpop.permute.xlu0 %1427
        %v1430 = vsel %vm735, %v1414, %v1420
        %vm1431 = vcmask 261120
        %v1432 = vsel %vm1431, %v1430, %v1424
        %vm1433 = vcmask 392192
        %v1434 = vsel %vm1433, %v1432, %v1428
        %v1435 = vpack.c.bf16 %v1434, %v1434
        %vm1436 = vcmask 519168
        %1437 = vst.msk [vmem:[%s259] sm:$0xf] %vm1436, %v1435
      $region40: #{residual_attention_block.5} parent=31 // pred_fallthru
        _
      %p1438 = scmp.lt.s32.totalorder %s19, 1
      %s1439 = scalar_select %p1438, %s19, 1
      %p1440 = scmp.lt.s32.totalorder %s20, 0
      %s1441 = scalar_select %p1440, %s20, 0
      %s1442 = sadd.s32 %s1441, %s1439
      %s1443 = smul.addr %s1442, 4
      %s1444 = scalar_lea.vmem %s3, %s1443
      // Predicated region
      $region41: #{residual_attention_block.5} parent=31 // pred_check
        %p1445 = pneg %p137
      $region42: #{residual_attention_block.5} parent=31 // pred_check_branch
        %1447 = sbr.rel (%p1445) target = $region44
      $region43: #{residual_attention_block.5} parent=31 // pred_region
        _
      $region44: #{residual_attention_block.5} parent=31 // pred_fallthru
        _
    $region32: #{residual_attention_block.5} parent=5 // pred_fallthru
      _
    %p1448 = scmp.le.s32.totalorder 2, %s9
    // Predicated region
    $region45: #{residual_attention_block.5} parent=5 // pred_check
      %p1449 = pneg %p1448
    $region46: #{residual_attention_block.5} parent=5 // pred_check_branch
      %1451 = sbr.rel (%p1449) target = $region48
    $region47: #{residual_attention_block.5} parent=5 // pred_region
      %s1452 = ssub.s32 %s9, 2
      // Predicated region
      $region49: #{residual_attention_block.5} parent=47 // pred_check
        %p1453 = pneg %p143
      $region50: #{residual_attention_block.5} parent=47 // pred_check_branch
        %1455 = sbr.rel (%p1453) target = $region52
      $region51: #{residual_attention_block.5} parent=47 // pred_region
        %p1456 = scmp.lt.s32.totalorder %s22, 1
        %s1457 = scalar_select %p1456, %s22, 1
        %p1458 = scmp.lt.s32.totalorder %s23, 0
        %s1459 = scalar_select %p1458, %s23, 0
        %s1460 = sadd.s32 %s1459, %s1457
        %s1461 = smul.addr %s1460, 4
        %s1462 = scalar_lea.vmem %s3, %s1461
      $region52: #{residual_attention_block.5} parent=47 // pred_fallthru
        _
    $region48: #{residual_attention_block.5} parent=5 // pred_fallthru
      _
  $region6: #{residual_attention_block.5} parent=0 // loop_footer
    %s13 = sadd.s32 1, %s9
  $region7: #{residual_attention_block.5} parent=0 // loop_footer_branch
    %8 = sbr.rel target = $region3
  $region8: #{residual_attention_block.5} parent=0 // loop_exit
    _

// kernel: residual_attention_block.7
$region0: #{residual_attention_block.7}
  #allocation0 [shape = 'u32[]', space=smem, size = 0x4, offset = 0x4, fixed_abs, tag = 'smem constant byte address 0x4 - core index']
  #allocation1 [shape = 'u32[144,128]{1,0:T(1,128)}', space=vmem, size = 0x12000, scoped, tag = 'internal scratch']
  #allocation2 [shape = 'f32[16,64]{1,0:T(8,128)}', space=vmem, size = 0x2000, scoped, tag = 'scratch operand']
  %s0 = inlined_call_operand.vmem [shape: bf16[16,256], index: 0, kind: input, shape index: {}]
  %s1 = inlined_call_operand.vmem [shape: bf16[256,64], index: 1, kind: input, shape index: {}]
  %s2 = inlined_call_operand.vmem [shape: f32[1,64], index: 2, kind: input, shape index: {}]
  %s3 = inlined_call_operand.vmem [shape: f32[16,64], index: 3, kind: input, shape index: {}]
  %s4 = inlined_call_operand.vmem [shape: f32[16,64], index: 4, kind: output, shape index: {}]
  %s5 = sld [smem:[#allocation0]]
  $region34: #{residual_attention_block.7} parent=0
    _
  %s7 = ssub.s32 1, %s5
  %s8 = scalar_select 0, %s7, %s5
  // Predicated region
  $region2: #{residual_attention_block.7} parent=0 // pred_check
    _
  $region3: #{residual_attention_block.7} parent=0 // pred_check_branch
    %10 = sbr.rel (0) target = $region5
  $region4: #{residual_attention_block.7} parent=0 // pred_region
    _
  $region5: #{residual_attention_block.7} parent=0 // pred_fallthru
    _
  // Predicated region
  $region6: #{residual_attention_block.7} parent=0 // pred_check
    _
  $region7: #{residual_attention_block.7} parent=0 // pred_check_branch
    %12 = sbr.rel (0) target = $region9
  $region8: #{residual_attention_block.7} parent=0 // pred_region
    _
  $region9: #{residual_attention_block.7} parent=0 // pred_fallthru
    _
  // Predicated region
  $region10: #{residual_attention_block.7} parent=0 // pred_check
    _
  $region11: #{residual_attention_block.7} parent=0 // pred_check_branch
    %14 = sbr.rel (0) target = $region13
  $region12: #{residual_attention_block.7} parent=0 // pred_region
    _
  $region13: #{residual_attention_block.7} parent=0 // pred_fallthru
    _
  // Predicated region
  $region14: #{residual_attention_block.7} parent=0 // pred_check
    _
  $region15: #{residual_attention_block.7} parent=0 // pred_check_branch
    %16 = sbr.rel (0) target = $region17
  $region16: #{residual_attention_block.7} parent=0 // pred_region
    _
  $region17: #{residual_attention_block.7} parent=0 // pred_fallthru
    _
  %p18 = scmp.eq.s32.totalorder 0, 0
  // Predicated region
  $region18: #{residual_attention_block.7} parent=0 // pred_check
    %p19 = pneg %p18
  $region19: #{residual_attention_block.7} parent=0 // pred_check_branch
    %21 = sbr.rel (%p19) target = $region21
  $region20: #{residual_attention_block.7} parent=0 // pred_region
    %vm22 = vcmask 523264
    %23 = vst.msk [vmem:[#allocation2] sm:$0xff] %vm22, 0.0
    %24 = vst.msk [vmem:[#allocation2 + $0x8] sm:$0xff] %vm22, 0.0
  $region21: #{residual_attention_block.7} parent=0 // pred_fallthru
    _
  %v25 = vld [vmem:[#allocation2] sm:$0xff]
  %v26 = vld [vmem:[#allocation2 + $0x8] sm:$0xff]
  %v27 = vld [vmem:[%s0] sm:$0xff]
  %v28 = vld [vmem:[%s0 + $0x8] sm:$0xff]
  %v29 = vld [vmem:[%s1] sm:$0xf]
  %v30 = vld [vmem:[%s1 + $0x4] sm:$0xf]
  %v31 = vld [vmem:[%s1 + $0x8] sm:$0xf]
  %v32 = vld [vmem:[%s1 + $0xc] sm:$0xf]
  %v33 = vld [vmem:[%s1 + $0x10] sm:$0xf]
  %v34 = vld [vmem:[%s1 + $0x14] sm:$0xf]
  %v35 = vld [vmem:[%s1 + $0x18] sm:$0xf]
  %v36 = vld [vmem:[%s1 + $0x1c] sm:$0xf]
  %v37 = vld [vmem:[%s1 + $0x20] sm:$0xf]
  %v38 = vld [vmem:[%s1 + $0x24] sm:$0xf]
  %v39 = vld [vmem:[%s1 + $0x28] sm:$0xf]
  %v40 = vld [vmem:[%s1 + $0x2c] sm:$0xf]
  %v41 = vld [vmem:[%s1 + $0x30] sm:$0xf]
  %v42 = vld [vmem:[%s1 + $0x34] sm:$0xf]
  %v43 = vld [vmem:[%s1 + $0x38] sm:$0xf]
  %v44 = vld [vmem:[%s1 + $0x3c] sm:$0xf]
  %v45 = vld [vmem:[%s1 + $0x40] sm:$0xf]
  %v46 = vld [vmem:[%s1 + $0x44] sm:$0xf]
  %v47 = vld [vmem:[%s1 + $0x48] sm:$0xf]
  %v48 = vld [vmem:[%s1 + $0x4c] sm:$0xf]
  %v49 = vld [vmem:[%s1 + $0x50] sm:$0xf]
  %v50 = vld [vmem:[%s1 + $0x54] sm:$0xf]
  %v51 = vld [vmem:[%s1 + $0x58] sm:$0xf]
  %v52 = vld [vmem:[%s1 + $0x5c] sm:$0xf]
  %v53 = vld [vmem:[%s1 + $0x60] sm:$0xf]
  %v54 = vld [vmem:[%s1 + $0x64] sm:$0xf]
  %v55 = vld [vmem:[%s1 + $0x68] sm:$0xf]
  %v56 = vld [vmem:[%s1 + $0x6c] sm:$0xf]
  %v57 = vld [vmem:[%s1 + $0x70] sm:$0xf]
  %v58 = vld [vmem:[%s1 + $0x74] sm:$0xf]
  %v59 = vld [vmem:[%s1 + $0x78] sm:$0xf]
  %v60 = vld [vmem:[%s1 + $0x7c] sm:$0xf]
  %v63 = vunpack.c.l.b16 %v27
  %v64 = vunpack.c.h.b16 %v27
  %v65 = vunpack.c.l.b16 %v28
  %v66 = vunpack.c.h.b16 %v28
  %v67 = vpack.c.b16 %v65, %v63
  %v68 = vpack.c.b16 %v66, %v64
  %v103 = vunpack.c.l.b16 %v29
  %v104 = vunpack.c.l.b16 %v30
  %v105 = vunpack.c.l.b16 %v31
  %v106 = vunpack.c.l.b16 %v32
  %v107 = vunpack.c.l.b16 %v33
  %v108 = vunpack.c.l.b16 %v34
  %v109 = vunpack.c.l.b16 %v35
  %v110 = vunpack.c.l.b16 %v36
  %v111 = vunpack.c.l.b16 %v37
  %v112 = vunpack.c.l.b16 %v38
  %v113 = vunpack.c.l.b16 %v39
  %v114 = vunpack.c.l.b16 %v40
  %v115 = vunpack.c.l.b16 %v41
  %v116 = vunpack.c.l.b16 %v42
  %v117 = vunpack.c.l.b16 %v43
  %v118 = vunpack.c.l.b16 %v44
  %v119 = vunpack.c.l.b16 %v45
  %v120 = vunpack.c.l.b16 %v46
  %v121 = vunpack.c.l.b16 %v47
  %v122 = vunpack.c.l.b16 %v48
  %v123 = vunpack.c.l.b16 %v49
  %v124 = vunpack.c.l.b16 %v50
  %v125 = vunpack.c.l.b16 %v51
  %v126 = vunpack.c.l.b16 %v52
  %v127 = vunpack.c.l.b16 %v53
  %v128 = vunpack.c.l.b16 %v54
  %v129 = vunpack.c.l.b16 %v55
  %v130 = vunpack.c.l.b16 %v56
  %v131 = vunpack.c.l.b16 %v57
  %v132 = vunpack.c.l.b16 %v58
  %v133 = vunpack.c.l.b16 %v59
  %v134 = vunpack.c.l.b16 %v60
  %v135 = vpack.c.b16 %v104, %v103
  %v136 = vpack.c.b16 %v106, %v105
  %v137 = vpack.c.b16 %v108, %v107
  %v138 = vpack.c.b16 %v110, %v109
  %v139 = vpack.c.b16 %v112, %v111
  %v140 = vpack.c.b16 %v114, %v113
  %v141 = vpack.c.b16 %v116, %v115
  %v142 = vpack.c.b16 %v118, %v117
  %v143 = vpack.c.b16 %v120, %v119
  %v144 = vpack.c.b16 %v122, %v121
  %v145 = vpack.c.b16 %v124, %v123
  %v146 = vpack.c.b16 %v126, %v125
  %v147 = vpack.c.b16 %v128, %v127
  %v148 = vpack.c.b16 %v130, %v129
  %v149 = vpack.c.b16 %v132, %v131
  %v150 = vpack.c.b16 %v134, %v133
  %167 = vmatprep.subr.bf16.mxu0 0
  %168 = vmatpush1.bf16.msra.mxu0 %v142
  %169 = vmatprep.subr.bf16.mxu0 0
  %170 = vmatpush1.bf16.msra.mxu0 %v141
  %171 = vmatprep.subr.bf16.mxu0 0
  %172 = vmatpush1.bf16.msra.mxu0 %v140
  %173 = vmatprep.subr.bf16.mxu0 0
  %174 = vmatpush1.bf16.msra.mxu0 %v139
  %175 = vmatprep.subr.bf16.mxu0 0
  %176 = vmatpush1.bf16.msra.mxu0 %v138
  %177 = vmatprep.subr.bf16.mxu0 0
  %178 = vmatpush1.bf16.msra.mxu0 %v137
  %179 = vmatprep.subr.bf16.mxu0 0
  %180 = vmatpush1.bf16.msra.mxu0 %v136
  %181 = vmatprep.subr.bf16.mxu0 0
  %182 = vmatpush1.bf16.msra.mxu0 %v135
  %183 = vmatprep.subr.bf16.mxu0 0
  %184 = vmatpush2.bf16.msra.mxu0 %v150
  %185 = vmatprep.subr.bf16.mxu0 0
  %186 = vmatpush2.bf16.msra.mxu0 %v149
  %187 = vmatprep.subr.bf16.mxu0 0
  %188 = vmatpush2.bf16.msra.mxu0 %v148
  %189 = vmatprep.subr.bf16.mxu0 0
  %190 = vmatpush2.bf16.msra.mxu0 %v147
  %191 = vmatprep.subr.bf16.mxu0 0
  %192 = vmatpush2.bf16.msra.mxu0 %v146
  %193 = vmatprep.subr.bf16.mxu0 0
  %194 = vmatpush2.bf16.msra.mxu0 %v145
  %195 = vmatprep.subr.bf16.mxu0 0
  %196 = vmatpush2.bf16.msra.mxu0 %v144
  %197 = vmatprep.subr.bf16.mxu0 0
  %198 = vmatpush2.bf16.msra.mxu0 %v143
  %199 = vmatprep.mubr.bf16.mxu0 %v68
  %200 = vmatmul.mubr.bf16.gmra.mxu0 %v67
  %v201 = vpop.f32.mrf.mxu0
  %v202 = vadd.f32 0.0, %v201
  %v203 = vpop.f32.mrf.mxu0
  %v204 = vpop.f32.mrf.mxu0
  %v205 = vadd.f32 0.0, %v204
  %v206 = vpop.f32.mrf.mxu0
  %207 = vdwg.mxu0
  %v208 = vadd.f32 %v25, %v202
  %v209 = vadd.f32 %v26, %v205
  %vm210 = vcmask 523264
  %211 = vst.msk [vmem:[#allocation2] sm:$0xff] %vm210, %v208
  %212 = vst.msk [vmem:[#allocation2 + $0x8] sm:$0xff] %vm210, %v209
  // Predicated region
  $region22: #{residual_attention_block.7} parent=0 // pred_check
    %p213 = pneg %p18
  $region23: #{residual_attention_block.7} parent=0 // pred_check_branch
    %215 = sbr.rel (%p213) target = $region25
  $region24: #{residual_attention_block.7} parent=0 // pred_region
    %v216 = vld [vmem:[#allocation2] sm:$0xff]
    %v217 = vld [vmem:[#allocation2 + $0x8] sm:$0xff]
    %v218 = vld [vmem:[%s2] sm:$0x1]
    %v220 = vlaneseq
    %v221 = vshrl.u32 %v220, 7
    %v222 = vsub.s32 0, %v221
    %v223 = vrot.slane %v218, %v222
    %v225 = vadd.f32 %v216, %v223
    %v226 = vadd.f32 %v217, %v223
    %v227 = vld [vmem:[%s3] sm:$0xff]
    %v228 = vld [vmem:[%s3 + $0x8] sm:$0xff]
    %v229 = vadd.f32 %v225, %v227
    %v230 = vadd.f32 %v226, %v228
    %231 = vst.msk [vmem:[%s4] sm:$0xff] %vm210, %v229
    %232 = vst.msk [vmem:[%s4 + $0x8] sm:$0xff] %vm210, %v230
  $region25: #{residual_attention_block.7} parent=0 // pred_fallthru
    _
  // Predicated region
  $region26: #{residual_attention_block.7} parent=0 // pred_check
    _
  $region27: #{residual_attention_block.7} parent=0 // pred_check_branch
    %234 = sbr.rel (0) target = $region29
  $region28: #{residual_attention_block.7} parent=0 // pred_region
    _
  $region29: #{residual_attention_block.7} parent=0 // pred_fallthru
    _
  // Predicated region
  $region30: #{residual_attention_block.7} parent=0 // pred_check
    _
  $region31: #{residual_attention_block.7} parent=0 // pred_check_branch
    %236 = sbr.rel (0) target = $region33
  $region32: #{residual_attention_block.7} parent=0 // pred_region
    _
  $region33: #{residual_attention_block.7} parent=0 // pred_fallthru
    _

</llo_original>
